<compile_context>
chip_gen: v5e
topology: v5e:2x2
jax: 0.10.0
libtpu: 0.0.40
codegen_flags: <defaults>
</compile_context>

<pallas_src>
import functools

import jax
import jax.numpy as jnp
from jax.experimental import pallas as pl
from jax.experimental.pallas import tpu as pltpu


def _round_up(x, m):
    return (x + m - 1) // m * m


def _mfh_kernel(x0_ref, x1_ref,
                w0_ref, b0_ref, w1_ref, b1_ref,
                wo_ref, bo_ref,
                o_ref, *, mm_p, factor, normalize):
    """One (tm, :) batch tile of the MFH forward pass (factor-major, padded columns)."""
    x0 = x0_ref[...]
    x1 = x1_ref[...]
    fm = factor * mm_p

    # Fused first-stage projections: each LHS goes through the MXU exactly once.
    # Columns [0:fm) of the fused weight are the "order-1" projection (a),
    # columns [fm:2fm) are the "order-2" projection (c).  bf16 operands, f32 acc.
    p0 = jnp.maximum(
        jnp.dot(x0, w0_ref[...], preferred_element_type=jnp.float32) + b0_ref[...], 0.0)
    p1 = jnp.maximum(
        jnp.dot(x1, w1_ref[...], preferred_element_type=jnp.float32) + b1_ref[...], 0.0)
    a0 = p0[:, :fm]
    c0 = p0[:, fm:]
    a1 = p1[:, :fm]
    c1 = p1[:, fm:]

    z0_skip = a0 * a1                       # (tm, factor*mm_p)
    z1_full = c0 * c1 * z0_skip             # (tm, factor*mm_p)

    # Sum over the factor axis.  Columns are factor-major and each factor block
    # is padded to mm_p (multiple of 128), so every chunk is a contiguous
    # lane-aligned slice -> plain VPU adds, no reshape / cross-lane shuffle.
    z0 = z0_skip[:, :mm_p]
    z1 = z1_full[:, :mm_p]
    for f in range(1, factor):
        z0 = z0 + z0_skip[:, f * mm_p:(f + 1) * mm_p]
        z1 = z1 + z1_full[:, f * mm_p:(f + 1) * mm_p]

    if normalize:
        # z0, z1 >= 0 (products / sums of relu outputs), so the reference's signed
        # sqrt reduces to a plain sqrt; L2-normalize via EUP rsqrt (eps matches
        # F.normalize: sqrt(1e-24) == 1e-12).  Padded columns are exactly 0.
        z0 = jnp.sqrt(z0)
        z1 = jnp.sqrt(z1)
        z0 = z0 * jax.lax.rsqrt(jnp.maximum(jnp.sum(z0 * z0, -1, keepdims=True), 1e-24))
        z1 = z1 * jax.lax.rsqrt(jnp.maximum(jnp.sum(z1 * z1, -1, keepdims=True), 1e-24))

    # Output projection: single K = 2*mm_p matmul on concat([z0, z1]) (both halves
    # are lane-aligned 128-multiples, so the concat is a cheap layout op).
    z = jnp.concatenate([z0, z1], axis=-1).astype(wo_ref.dtype)
    out = jnp.dot(z, wo_ref[...], preferred_element_type=jnp.float32) + bo_ref[...]
    o_ref[...] = jnp.maximum(out, 0.0).astype(o_ref.dtype)


def _factor_major_padded(w, b, mm_dim, factor, mm_p):
    """Permute (in, mm*factor) columns from (m, f)-interleaved to (f, m)-blocked,
    padding each factor block to mm_p columns (lane-aligned)."""
    in_dim = w.shape[0]
    w = w.reshape(in_dim, mm_dim, factor).transpose(0, 2, 1)            # (in, f, mm)
    w = jnp.pad(w, ((0, 0), (0, 0), (0, mm_p - mm_dim)))
    w = w.reshape(in_dim, factor * mm_p)
    b = b.reshape(mm_dim, factor).T                                     # (f, mm)
    b = jnp.pad(b, ((0, 0), (0, mm_p - mm_dim))).reshape(factor * mm_p)
    return w, b


def mfh_forward(x0, x1, params, *, mm_dim=128, factor=2, normalize=False,
                compute_dtype=jnp.bfloat16, out_dtype=jnp.float32, block_m=256):
    """MFH forward: x0 (B, d0), x1 (B, d1) -> (B, output_dim) in out_dtype."""
    w00, b00, w10, b10, w01, b01, w11, b11, wo, bo = params
    B, d0 = x0.shape
    d1 = x1.shape[1]
    out_dim = wo.shape[1]

    # ---- wrapper-side layout prep (one-off XLA ops, outside the kernel) ----
    mm_p = _round_up(mm_dim, 128)
    fm = factor * mm_p

    # Factor-major (padded) column permutation of the four first-stage projections,
    # then fuse the two projections that share each LHS: [W00 | W01], [W10 | W11].
    w00, b00 = _factor_major_padded(w00, b00, mm_dim, factor, mm_p)
    w01, b01 = _factor_major_padded(w01, b01, mm_dim, factor, mm_p)
    w10, b10 = _factor_major_padded(w10, b10, mm_dim, factor, mm_p)
    w11, b11 = _factor_major_padded(w11, b11, mm_dim, factor, mm_p)
    w0 = jnp.concatenate([w00, w01], axis=1)            # (d0, 2*fm)
    b0 = jnp.concatenate([b00, b01], axis=0)            # (2*fm,)
    w1 = jnp.concatenate([w10, w11], axis=1)            # (d1, 2*fm)
    b1 = jnp.concatenate([b10, b11], axis=0)

    # Output projection: pad each mm_dim row block to mm_p rows (matching the
    # zero-padded z0/z1 columns) and the output dim to a lane multiple.
    outp = _round_up(out_dim, 128)
    wo0 = jnp.pad(wo[:mm_dim, :], ((0, mm_p - mm_dim), (0, outp - out_dim)))
    wo1 = jnp.pad(wo[mm_dim:2 * mm_dim, :], ((0, mm_p - mm_dim), (0, outp - out_dim)))
    wo_p = jnp.concatenate([wo0, wo1], axis=0)           # (2*mm_p, outp)
    bo_p = jnp.pad(bo, (0, outp - out_dim))

    # Pad contraction dims to lane multiples (128): dense loads.
    d0p = _round_up(d0, 128)
    d1p = _round_up(d1, 128)
    x0 = jnp.pad(x0, ((0, 0), (0, d0p - d0)))
    x1 = jnp.pad(x1, ((0, 0), (0, d1p - d1)))
    w0 = jnp.pad(w0, ((0, d0p - d0), (0, 0)))
    w1 = jnp.pad(w1, ((0, d1p - d1), (0, 0)))

    # Batch tiling: multiple of 16 for bf16 sublane packing; for B > 16 split the
    # batch into at least 2 tiles so the "parallel" axis shards across both
    # TensorCores on v7x (weights are small enough to duplicate per core).
    if B > 16:
        tm = min(block_m, _round_up(-(-B // 2), 16))
    else:
        tm = _round_up(B, 16)
    bp = _round_up(B, tm)
    x0 = jnp.pad(x0, ((0, bp - B), (0, 0)))
    x1 = jnp.pad(x1, ((0, bp - B), (0, 0)))
    grid = (bp // tm,)

    # bf16 activations/weights (halves VMEM + HBM bytes); biases stay f32 rows.
    cd = compute_dtype
    x0 = x0.astype(cd)
    x1 = x1.astype(cd)
    w0 = w0.astype(cd)
    w1 = w1.astype(cd)
    wo_p = wo_p.astype(cd)
    b0 = b0.reshape(1, -1).astype(jnp.float32)
    b1 = b1.reshape(1, -1).astype(jnp.float32)
    bo_p = bo_p.reshape(1, -1).astype(jnp.float32)

    out_bytes = jnp.dtype(out_dtype).itemsize
    resident_bytes = ((w0.size + w1.size + wo_p.size) * 2
                      + (b0.size + b1.size + bo_p.size) * 4)
    stream_bytes = 2 * tm * (d0p + d1p) * 2 + 2 * tm * outp * out_bytes
    # Cap at 48 MiB: safe on v7x's 64 MiB physical VMEM, ample on v5e/v6e.
    vmem_limit = int(max(32 << 20, min(2 * resident_bytes + stream_bytes + (8 << 20),
                                       48 << 20)))

    cost = pl.CostEstimate(
        flops=int(4 * bp * (d0p + d1p) * fm + 4 * bp * mm_p * outp),
        transcendentals=int(4 * bp * mm_p) if normalize else 0,
        bytes_accessed=int(bp * (d0p + d1p) * 2            # x0, x1 (bf16)
                           + (d0p + d1p) * 2 * fm * 2      # fused projection weights
                           + 2 * mm_p * outp * 2           # output weight
                           + (4 * fm + outp) * 4           # biases (f32)
                           + bp * outp * out_bytes))       # output

    kernel = functools.partial(_mfh_kernel, mm_p=mm_p, factor=factor,
                               normalize=normalize)
    args = (x0, x1, w0, b0, w1, b1, wo_p, bo_p)

    def build(single_buffer_weights):
        tile = lambda dp: pl.BlockSpec((tm, dp), lambda i: (i, 0))

        def resident(a):
            kw = {}
            if single_buffer_weights:
                # Resident operands never change block -> single-buffer them to
                # halve their VMEM footprint (matters most on v7x's 64 MiB VMEM).
                kw["pipeline_mode"] = pl.Buffered(1)
            return pl.BlockSpec(a.shape, lambda i: (0, 0), **kw)

        return pl.pallas_call(
            kernel,
            out_shape=jax.ShapeDtypeStruct((bp, outp), out_dtype),
            grid_spec=pltpu.PrefetchScalarGridSpec(
                num_scalar_prefetch=0,
                grid=grid,
                in_specs=[tile(d0p), tile(d1p),
                          resident(w0), resident(b0),
                          resident(w1), resident(b1),
                          resident(wo_p), resident(bo_p)],
                out_specs=pl.BlockSpec((tm, outp), lambda i: (i, 0)),
            ),
            compiler_params=pltpu.CompilerParams(
                dimension_semantics=("parallel",),
                vmem_limit_bytes=vmem_limit),
            cost_estimate=cost,
        )

    try:
        out = build(True)(*args)
    except Exception:
        # Fallback: default double-buffered resident operands (still correct).
        out = build(False)(*args)

    return out[:B, :out_dim]


def init_mfh_params(key, input_dims, output_dim, mm_dim=128, factor=2):
    """Deterministic PyTorch-style uniform init; weights stored pre-transposed (in, out)."""
    def linear(k, fan_in, fan_out):
        kw, kb = jax.random.split(k)
        bound = 1.0 / jnp.sqrt(fan_in)
        w = jax.random.uniform(kw, (fan_in, fan_out), jnp.float32, -bound, bound)
        b = jax.random.uniform(kb, (fan_out,), jnp.float32, -bound, bound)
        return w, b

    k = jax.random.split(key, 5)
    w00, b00 = linear(k[0], input_dims[0], mm_dim * factor)
    w10, b10 = linear(k[1], input_dims[1], mm_dim * factor)
    w01, b01 = linear(k[2], input_dims[0], mm_dim * factor)
    w11, b11 = linear(k[3], input_dims[1], mm_dim * factor)
    wo, bo = linear(k[4], mm_dim * 2, output_dim)
    return (w00, b00, w10, b10, w01, b01, w11, b11, wo, bo)


def mfh_reference(x0, x1, params, *, mm_dim=128, factor=2, normalize=False,
                  compute_dtype=None):
    """Pure-JAX MFH reference.  compute_dtype emulates the kernel's operand precision."""
    w00, b00, w10, b10, w01, b01, w11, b11, wo, bo = params
    if compute_dtype is not None:
        cast = lambda a: a.astype(compute_dtype).astype(jnp.float32)
        x0, x1 = cast(x0), cast(x1)
        w00, w10, w01, w11, wo = cast(w00), cast(w10), cast(w01), cast(w11), cast(wo)
    B = x0.shape[0]
    a0 = jax.nn.relu(x0 @ w00 + b00)
    a1 = jax.nn.relu(x1 @ w10 + b10)
    z0_skip = a0 * a1
    z0 = z0_skip.reshape(B, mm_dim, factor).sum(-1)
    if normalize:
        z0 = jnp.sqrt(jax.nn.relu(z0)) - jnp.sqrt(jax.nn.relu(-z0))
        z0 = z0 / jnp.maximum(jnp.linalg.norm(z0, axis=-1, keepdims=True), 1e-12)
    c0 = jax.nn.relu(x0 @ w01 + b01)
    c1 = jax.nn.relu(x1 @ w11 + b11)
    z1 = (c0 * c1 * z0_skip).reshape(B, mm_dim, factor).sum(-1)
    if normalize:
        z1 = jnp.sqrt(jax.nn.relu(z1)) - jnp.sqrt(jax.nn.relu(-z1))
        z1 = z1 / jnp.maximum(jnp.linalg.norm(z1, axis=-1, keepdims=True), 1e-12)
    z = jnp.concatenate([z0, z1], axis=-1)
    if compute_dtype is not None:
        z = z.astype(compute_dtype).astype(jnp.float32)
    return jax.nn.relu(z @ wo + bo)


if __name__ == "__main__":
    # Small shapes consistent with the module: two modality vectors per example.
    B = 8
    input_dims = (32, 48)
    mm_dim = 128
    factor = 2
    output_dim = 64

    key = jax.random.PRNGKey(0)
    kp, kx0, kx1 = jax.random.split(key, 3)
    params = init_mfh_params(kp, input_dims, output_dim, mm_dim, factor)
    x0 = jax.random.normal(kx0, (B, input_dims[0]), jnp.float32)
    x1 = jax.random.normal(kx1, (B, input_dims[1]), jnp.float32)

    out = mfh_forward(x0, x1, params, mm_dim=mm_dim, factor=factor, normalize=False)
    out = jax.block_until_ready(out)
    assert out.shape == (B, output_dim)

    # Reference emulating the kernel's bf16 operand precision (f32 accumulation).
    ref = mfh_reference(x0, x1, params, mm_dim=mm_dim, factor=factor,
                        normalize=False, compute_dtype=jnp.bfloat16)
    assert jnp.allclose(out, ref, atol=1e-3, rtol=1e-3), "mismatch vs reference"

    # Exercise the normalize branch (simplified sqrt + rsqrt path).
    out_n = jax.block_until_ready(
        mfh_forward(x0, x1, params, mm_dim=mm_dim, factor=factor, normalize=True))
    ref_n = mfh_reference(x0, x1, params, mm_dim=mm_dim, factor=factor,
                          normalize=True, compute_dtype=jnp.bfloat16)
    assert jnp.allclose(out_n, ref_n, atol=2e-2, rtol=2e-2), "mismatch (normalize)"

    print("KERNEL_OK")
</pallas_src>

<mosaic_0001>
module attributes {stable_mosaic.version = 11 : i64} {
  func.func @_mfh_kernel(%arg0: i32, %arg1: memref<16x128xbf16, #tpu.memory_space<vmem>>, %arg2: memref<16x128xbf16, #tpu.memory_space<vmem>>, %arg3: memref<128x512xbf16, #tpu.memory_space<vmem>>, %arg4: memref<1x512xf32, #tpu.memory_space<vmem>>, %arg5: memref<128x512xbf16, #tpu.memory_space<vmem>>, %arg6: memref<1x512xf32, #tpu.memory_space<vmem>>, %arg7: memref<256x128xbf16, #tpu.memory_space<vmem>>, %arg8: memref<1x128xf32, #tpu.memory_space<vmem>>, %arg9: memref<16x128xf32, #tpu.memory_space<vmem>>) attributes {dimension_semantics = [#tpu.dimension_semantics<parallel>], iteration_bounds = array<i64: 1>, scalar_prefetch = 0 : i64, scratch_operands = 0 : i64, tpu.core_type = #tpu.core_type<tc>, window_params = [{transform_indices = @transform_0, window_bounds = array<i64: 16, 128>}, {transform_indices = @transform_1, window_bounds = array<i64: 16, 128>}, {pipeline_mode = #tpu.pipeline_mode<synchronous>, transform_indices = @transform_2, window_bounds = array<i64: 128, 512>}, {pipeline_mode = #tpu.pipeline_mode<synchronous>, transform_indices = @transform_3, window_bounds = array<i64: 1, 512>}, {pipeline_mode = #tpu.pipeline_mode<synchronous>, transform_indices = @transform_4, window_bounds = array<i64: 128, 512>}, {pipeline_mode = #tpu.pipeline_mode<synchronous>, transform_indices = @transform_5, window_bounds = array<i64: 1, 512>}, {pipeline_mode = #tpu.pipeline_mode<synchronous>, transform_indices = @transform_6, window_bounds = array<i64: 256, 128>}, {pipeline_mode = #tpu.pipeline_mode<synchronous>, transform_indices = @transform_7, window_bounds = array<i64: 1, 128>}, {transform_indices = @transform_8, window_bounds = array<i64: 16, 128>}]} {
    %c0 = arith.constant 0 : index
    %c0_0 = arith.constant 0 : index
    %0 = vector.load %arg1[%c0, %c0_0] : memref<16x128xbf16, #tpu.memory_space<vmem>>, vector<16x128xbf16>
    %c0_1 = arith.constant 0 : index
    %c0_2 = arith.constant 0 : index
    %1 = vector.load %arg2[%c0_1, %c0_2] : memref<16x128xbf16, #tpu.memory_space<vmem>>, vector<16x128xbf16>
    %c0_3 = arith.constant 0 : index
    %c0_4 = arith.constant 0 : index
    %2 = vector.load %arg3[%c0_3, %c0_4] : memref<128x512xbf16, #tpu.memory_space<vmem>>, vector<128x512xbf16>
    %cst = arith.constant dense<0.000000e+00> : vector<16x512xf32>
    %3 = tpu.matmul %0, %2, %cst {dimension_numbers = #tpu.dot_dimension_numbers<[1], [0], [0], [1], [0, 0, 1, 1], [], []>} : vector<16x128xbf16>, vector<128x512xbf16>, vector<16x512xf32> -> vector<16x512xf32>
    %c0_5 = arith.constant 0 : index
    %c0_6 = arith.constant 0 : index
    %4 = vector.load %arg4[%c0_5, %c0_6] : memref<1x512xf32, #tpu.memory_space<vmem>>, vector<1x512xf32>
    %5 = vector.broadcast %4 : vector<1x512xf32> to vector<16x512xf32>
    %6 = arith.addf %3, %5 : vector<16x512xf32>
    %cst_7 = arith.constant 0.000000e+00 : f32
    %7 = vector.broadcast %cst_7 : f32 to vector<16x512xf32>
    %8 = arith.maximumf %6, %7 : vector<16x512xf32>
    %c0_8 = arith.constant 0 : index
    %c0_9 = arith.constant 0 : index
    %9 = vector.load %arg5[%c0_8, %c0_9] : memref<128x512xbf16, #tpu.memory_space<vmem>>, vector<128x512xbf16>
    %cst_10 = arith.constant dense<0.000000e+00> : vector<16x512xf32>
    %10 = tpu.matmul %1, %9, %cst_10 {dimension_numbers = #tpu.dot_dimension_numbers<[1], [0], [0], [1], [0, 0, 1, 1], [], []>} : vector<16x128xbf16>, vector<128x512xbf16>, vector<16x512xf32> -> vector<16x512xf32>
    %c0_11 = arith.constant 0 : index
    %c0_12 = arith.constant 0 : index
    %11 = vector.load %arg6[%c0_11, %c0_12] : memref<1x512xf32, #tpu.memory_space<vmem>>, vector<1x512xf32>
    %12 = vector.broadcast %11 : vector<1x512xf32> to vector<16x512xf32>
    %13 = arith.addf %10, %12 : vector<16x512xf32>
    %cst_13 = arith.constant 0.000000e+00 : f32
    %14 = vector.broadcast %cst_13 : f32 to vector<16x512xf32>
    %15 = arith.maximumf %13, %14 : vector<16x512xf32>
    %16 = vector.extract_strided_slice %8 {offsets = [0, 0], sizes = [16, 256], strides = [1, 1]} : vector<16x512xf32> to vector<16x256xf32>
    %17 = vector.extract_strided_slice %8 {offsets = [0, 256], sizes = [16, 256], strides = [1, 1]} : vector<16x512xf32> to vector<16x256xf32>
    %18 = vector.extract_strided_slice %15 {offsets = [0, 0], sizes = [16, 256], strides = [1, 1]} : vector<16x512xf32> to vector<16x256xf32>
    %19 = vector.extract_strided_slice %15 {offsets = [0, 256], sizes = [16, 256], strides = [1, 1]} : vector<16x512xf32> to vector<16x256xf32>
    %20 = arith.mulf %16, %18 : vector<16x256xf32>
    %21 = arith.mulf %17, %19 : vector<16x256xf32>
    %22 = arith.mulf %21, %20 : vector<16x256xf32>
    %23 = vector.extract_strided_slice %20 {offsets = [0, 0], sizes = [16, 128], strides = [1, 1]} : vector<16x256xf32> to vector<16x128xf32>
    %24 = vector.extract_strided_slice %22 {offsets = [0, 0], sizes = [16, 128], strides = [1, 1]} : vector<16x256xf32> to vector<16x128xf32>
    %25 = vector.extract_strided_slice %20 {offsets = [0, 128], sizes = [16, 128], strides = [1, 1]} : vector<16x256xf32> to vector<16x128xf32>
    %26 = arith.addf %23, %25 : vector<16x128xf32>
    %27 = vector.extract_strided_slice %22 {offsets = [0, 128], sizes = [16, 128], strides = [1, 1]} : vector<16x256xf32> to vector<16x128xf32>
    %28 = arith.addf %24, %27 : vector<16x128xf32>
    %29 = tpu.concatenate %26, %28 in 1 : vector<16x128xf32>, vector<16x128xf32> -> vector<16x256xf32>
    %30 = arith.truncf %29 : vector<16x256xf32> to vector<16x256xbf16>
    %c0_14 = arith.constant 0 : index
    %c0_15 = arith.constant 0 : index
    %31 = vector.load %arg7[%c0_14, %c0_15] : memref<256x128xbf16, #tpu.memory_space<vmem>>, vector<256x128xbf16>
    %cst_16 = arith.constant dense<0.000000e+00> : vector<16x128xf32>
    %32 = tpu.matmul %30, %31, %cst_16 {dimension_numbers = #tpu.dot_dimension_numbers<[1], [0], [0], [1], [0, 0, 1, 1], [], []>} : vector<16x256xbf16>, vector<256x128xbf16>, vector<16x128xf32> -> vector<16x128xf32>
    %c0_17 = arith.constant 0 : index
    %c0_18 = arith.constant 0 : index
    %33 = vector.load %arg8[%c0_17, %c0_18] : memref<1x128xf32, #tpu.memory_space<vmem>>, vector<1x128xf32>
    %34 = vector.broadcast %33 : vector<1x128xf32> to vector<16x128xf32>
    %35 = arith.addf %32, %34 : vector<16x128xf32>
    %cst_19 = arith.constant 0.000000e+00 : f32
    %36 = vector.broadcast %cst_19 : f32 to vector<16x128xf32>
    %37 = arith.maximumf %35, %36 : vector<16x128xf32>
    %c0_20 = arith.constant 0 : index
    %c0_21 = arith.constant 0 : index
    %38 = vector.load %arg9[%c0_20, %c0_21] : memref<16x128xf32, #tpu.memory_space<vmem>>, vector<16x128xf32>
    tpu.vector_store %arg9[%c0_20, %c0_21], %37 {strides = array<i32>} : memref<16x128xf32, #tpu.memory_space<vmem>>, vector<16x128xf32>,
    return
  }
  func.func @transform_0(%arg0: i32) -> (i32, i32) {
    %c0_i32 = arith.constant 0 : i32
    %c0_i32_0 = arith.constant 0 : i32
    return %arg0, %c0_i32 : i32, i32
  }
  func.func @transform_1(%arg0: i32) -> (i32, i32) {
    %c0_i32 = arith.constant 0 : i32
    %c0_i32_0 = arith.constant 0 : i32
    return %arg0, %c0_i32 : i32, i32
  }
  func.func @transform_2(%arg0: i32) -> (i32, i32) {
    %c0_i32 = arith.constant 0 : i32
    %c0_i32_0 = arith.constant 0 : i32
    %c0_i32_1 = arith.constant 0 : i32
    return %c0_i32, %c0_i32_0 : i32, i32
  }
  func.func @transform_3(%arg0: i32) -> (i32, i32) {
    %c0_i32 = arith.constant 0 : i32
    %c0_i32_0 = arith.constant 0 : i32
    %c0_i32_1 = arith.constant 0 : i32
    return %c0_i32, %c0_i32_0 : i32, i32
  }
  func.func @transform_4(%arg0: i32) -> (i32, i32) {
    %c0_i32 = arith.constant 0 : i32
    %c0_i32_0 = arith.constant 0 : i32
    %c0_i32_1 = arith.constant 0 : i32
    return %c0_i32, %c0_i32_0 : i32, i32
  }
  func.func @transform_5(%arg0: i32) -> (i32, i32) {
    %c0_i32 = arith.constant 0 : i32
    %c0_i32_0 = arith.constant 0 : i32
    %c0_i32_1 = arith.constant 0 : i32
    return %c0_i32, %c0_i32_0 : i32, i32
  }
  func.func @transform_6(%arg0: i32) -> (i32, i32) {
    %c0_i32 = arith.constant 0 : i32
    %c0_i32_0 = arith.constant 0 : i32
    %c0_i32_1 = arith.constant 0 : i32
    return %c0_i32, %c0_i32_0 : i32, i32
  }
  func.func @transform_7(%arg0: i32) -> (i32, i32) {
    %c0_i32 = arith.constant 0 : i32
    %c0_i32_0 = arith.constant 0 : i32
    %c0_i32_1 = arith.constant 0 : i32
    return %c0_i32, %c0_i32_0 : i32, i32
  }
  func.func @transform_8(%arg0: i32) -> (i32, i32) {
    %c0_i32 = arith.constant 0 : i32
    %c0_i32_0 = arith.constant 0 : i32
    return %arg0, %c0_i32 : i32, i32
  }
}

module attributes {stable_mosaic.version = 11 : i64} {
  func.func @_mfh_kernel(%arg0: i32, %arg1: memref<16x128xbf16, #tpu.memory_space<vmem>>, %arg2: memref<16x128xbf16, #tpu.memory_space<vmem>>, %arg3: memref<128x512xbf16, #tpu.memory_space<vmem>>, %arg4: memref<1x512xf32, #tpu.memory_space<vmem>>, %arg5: memref<128x512xbf16, #tpu.memory_space<vmem>>, %arg6: memref<1x512xf32, #tpu.memory_space<vmem>>, %arg7: memref<256x128xbf16, #tpu.memory_space<vmem>>, %arg8: memref<1x128xf32, #tpu.memory_space<vmem>>, %arg9: memref<16x128xf32, #tpu.memory_space<vmem>>) attributes {dimension_semantics = [#tpu.dimension_semantics<parallel>], iteration_bounds = array<i64: 1>, scalar_prefetch = 0 : i64, scratch_operands = 0 : i64, tpu.core_type = #tpu.core_type<tc>, window_params = [{transform_indices = @transform_0, window_bounds = array<i64: 16, 128>}, {transform_indices = @transform_1, window_bounds = array<i64: 16, 128>}, {pipeline_mode = #tpu.pipeline_mode<synchronous>, transform_indices = @transform_2, window_bounds = array<i64: 128, 512>}, {pipeline_mode = #tpu.pipeline_mode<synchronous>, transform_indices = @transform_3, window_bounds = array<i64: 1, 512>}, {pipeline_mode = #tpu.pipeline_mode<synchronous>, transform_indices = @transform_4, window_bounds = array<i64: 128, 512>}, {pipeline_mode = #tpu.pipeline_mode<synchronous>, transform_indices = @transform_5, window_bounds = array<i64: 1, 512>}, {pipeline_mode = #tpu.pipeline_mode<synchronous>, transform_indices = @transform_6, window_bounds = array<i64: 256, 128>}, {pipeline_mode = #tpu.pipeline_mode<synchronous>, transform_indices = @transform_7, window_bounds = array<i64: 1, 128>}, {transform_indices = @transform_8, window_bounds = array<i64: 16, 128>}]} {
    %c0 = arith.constant 0 : index
    %c0_0 = arith.constant 0 : index
    %0 = vector.load %arg1[%c0, %c0_0] : memref<16x128xbf16, #tpu.memory_space<vmem>>, vector<16x128xbf16>
    %c0_1 = arith.constant 0 : index
    %c0_2 = arith.constant 0 : index
    %1 = vector.load %arg2[%c0_1, %c0_2] : memref<16x128xbf16, #tpu.memory_space<vmem>>, vector<16x128xbf16>
    %c0_3 = arith.constant 0 : index
    %c0_4 = arith.constant 0 : index
    %2 = vector.load %arg3[%c0_3, %c0_4] : memref<128x512xbf16, #tpu.memory_space<vmem>>, vector<128x512xbf16>
    %cst = arith.constant dense<0.000000e+00> : vector<16x512xf32>
    %3 = tpu.matmul %0, %2, %cst {dimension_numbers = #tpu.dot_dimension_numbers<[1], [0], [0], [1], [0, 0, 1, 1], [], []>} : vector<16x128xbf16>, vector<128x512xbf16>, vector<16x512xf32> -> vector<16x512xf32>
    %c0_5 = arith.constant 0 : index
    %c0_6 = arith.constant 0 : index
    %4 = vector.load %arg4[%c0_5, %c0_6] : memref<1x512xf32, #tpu.memory_space<vmem>>, vector<1x512xf32>
    %5 = vector.broadcast %4 : vector<1x512xf32> to vector<16x512xf32>
    %6 = arith.addf %3, %5 : vector<16x512xf32>
    %cst_7 = arith.constant 0.000000e+00 : f32
    %7 = vector.broadcast %cst_7 : f32 to vector<16x512xf32>
    %8 = arith.maximumf %6, %7 : vector<16x512xf32>
    %c0_8 = arith.constant 0 : index
    %c0_9 = arith.constant 0 : index
    %9 = vector.load %arg5[%c0_8, %c0_9] : memref<128x512xbf16, #tpu.memory_space<vmem>>, vector<128x512xbf16>
    %cst_10 = arith.constant dense<0.000000e+00> : vector<16x512xf32>
    %10 = tpu.matmul %1, %9, %cst_10 {dimension_numbers = #tpu.dot_dimension_numbers<[1], [0], [0], [1], [0, 0, 1, 1], [], []>} : vector<16x128xbf16>, vector<128x512xbf16>, vector<16x512xf32> -> vector<16x512xf32>
    %c0_11 = arith.constant 0 : index
    %c0_12 = arith.constant 0 : index
    %11 = vector.load %arg6[%c0_11, %c0_12] : memref<1x512xf32, #tpu.memory_space<vmem>>, vector<1x512xf32>
    %12 = vector.broadcast %11 : vector<1x512xf32> to vector<16x512xf32>
    %13 = arith.addf %10, %12 : vector<16x512xf32>
    %cst_13 = arith.constant 0.000000e+00 : f32
    %14 = vector.broadcast %cst_13 : f32 to vector<16x512xf32>
    %15 = arith.maximumf %13, %14 : vector<16x512xf32>
    %16 = vector.extract_strided_slice %8 {offsets = [0, 0], sizes = [16, 256], strides = [1, 1]} : vector<16x512xf32> to vector<16x256xf32>
    %17 = vector.extract_strided_slice %8 {offsets = [0, 256], sizes = [16, 256], strides = [1, 1]} : vector<16x512xf32> to vector<16x256xf32>
    %18 = vector.extract_strided_slice %15 {offsets = [0, 0], sizes = [16, 256], strides = [1, 1]} : vector<16x512xf32> to vector<16x256xf32>
    %19 = vector.extract_strided_slice %15 {offsets = [0, 256], sizes = [16, 256], strides = [1, 1]} : vector<16x512xf32> to vector<16x256xf32>
    %20 = arith.mulf %16, %18 : vector<16x256xf32>
    %21 = arith.mulf %17, %19 : vector<16x256xf32>
    %22 = arith.mulf %21, %20 : vector<16x256xf32>
    %23 = vector.extract_strided_slice %20 {offsets = [0, 0], sizes = [16, 128], strides = [1, 1]} : vector<16x256xf32> to vector<16x128xf32>
    %24 = vector.extract_strided_slice %22 {offsets = [0, 0], sizes = [16, 128], strides = [1, 1]} : vector<16x256xf32> to vector<16x128xf32>
    %25 = vector.extract_strided_slice %20 {offsets = [0, 128], sizes = [16, 128], strides = [1, 1]} : vector<16x256xf32> to vector<16x128xf32>
    %26 = arith.addf %23, %25 : vector<16x128xf32>
    %27 = vector.extract_strided_slice %22 {offsets = [0, 128], sizes = [16, 128], strides = [1, 1]} : vector<16x256xf32> to vector<16x128xf32>
    %28 = arith.addf %24, %27 : vector<16x128xf32>
    %29 = tpu.concatenate %26, %28 in 1 : vector<16x128xf32>, vector<16x128xf32> -> vector<16x256xf32>
    %30 = arith.truncf %29 : vector<16x256xf32> to vector<16x256xbf16>
    %c0_14 = arith.constant 0 : index
    %c0_15 = arith.constant 0 : index
    %31 = vector.load %arg7[%c0_14, %c0_15] : memref<256x128xbf16, #tpu.memory_space<vmem>>, vector<256x128xbf16>
    %cst_16 = arith.constant dense<0.000000e+00> : vector<16x128xf32>
    %32 = tpu.matmul %30, %31, %cst_16 {dimension_numbers = #tpu.dot_dimension_numbers<[1], [0], [0], [1], [0, 0, 1, 1], [], []>} : vector<16x256xbf16>, vector<256x128xbf16>, vector<16x128xf32> -> vector<16x128xf32>
    %c0_17 = arith.constant 0 : index
    %c0_18 = arith.constant 0 : index
    %33 = vector.load %arg8[%c0_17, %c0_18] : memref<1x128xf32, #tpu.memory_space<vmem>>, vector<1x128xf32>
    %34 = vector.broadcast %33 : vector<1x128xf32> to vector<16x128xf32>
    %35 = arith.addf %32, %34 : vector<16x128xf32>
    %cst_19 = arith.constant 0.000000e+00 : f32
    %36 = vector.broadcast %cst_19 : f32 to vector<16x128xf32>
    %37 = arith.maximumf %35, %36 : vector<16x128xf32>
    %c0_20 = arith.constant 0 : index
    %c0_21 = arith.constant 0 : index
    %38 = vector.load %arg9[%c0_20, %c0_21] : memref<16x128xf32, #tpu.memory_space<vmem>>, vector<16x128xf32>
    tpu.vector_store %arg9[%c0_20, %c0_21], %37 {strides = array<i32>} : memref<16x128xf32, #tpu.memory_space<vmem>>, vector<16x128xf32>,
    return
  }
  func.func @transform_0(%arg0: i32) -> (i32, i32) {
    %c0_i32 = arith.constant 0 : i32
    %c0_i32_0 = arith.constant 0 : i32
    return %arg0, %c0_i32 : i32, i32
  }
  func.func @transform_1(%arg0: i32) -> (i32, i32) {
    %c0_i32 = arith.constant 0 : i32
    %c0_i32_0 = arith.constant 0 : i32
    return %arg0, %c0_i32 : i32, i32
  }
  func.func @transform_2(%arg0: i32) -> (i32, i32) {
    %c0_i32 = arith.constant 0 : i32
    %c0_i32_0 = arith.constant 0 : i32
    %c0_i32_1 = arith.constant 0 : i32
    return %c0_i32, %c0_i32_0 : i32, i32
  }
  func.func @transform_3(%arg0: i32) -> (i32, i32) {
    %c0_i32 = arith.constant 0 : i32
    %c0_i32_0 = arith.constant 0 : i32
    %c0_i32_1 = arith.constant 0 : i32
    return %c0_i32, %c0_i32_0 : i32, i32
  }
  func.func @transform_4(%arg0: i32) -> (i32, i32) {
    %c0_i32 = arith.constant 0 : i32
    %c0_i32_0 = arith.constant 0 : i32
    %c0_i32_1 = arith.constant 0 : i32
    return %c0_i32, %c0_i32_0 : i32, i32
  }
  func.func @transform_5(%arg0: i32) -> (i32, i32) {
    %c0_i32 = arith.constant 0 : i32
    %c0_i32_0 = arith.constant 0 : i32
    %c0_i32_1 = arith.constant 0 : i32
    return %c0_i32, %c0_i32_0 : i32, i32
  }
  func.func @transform_6(%arg0: i32) -> (i32, i32) {
    %c0_i32 = arith.constant 0 : i32
    %c0_i32_0 = arith.constant 0 : i32
    %c0_i32_1 = arith.constant 0 : i32
    return %c0_i32, %c0_i32_0 : i32, i32
  }
  func.func @transform_7(%arg0: i32) -> (i32, i32) {
    %c0_i32 = arith.constant 0 : i32
    %c0_i32_0 = arith.constant 0 : i32
    %c0_i32_1 = arith.constant 0 : i32
    return %c0_i32, %c0_i32_0 : i32, i32
  }
  func.func @transform_8(%arg0: i32) -> (i32, i32) {
    %c0_i32 = arith.constant 0 : i32
    %c0_i32_0 = arith.constant 0 : i32
    return %arg0, %c0_i32 : i32, i32
  }
}

</mosaic_0001>

<llo_original>
// kernel: tpu_custom_call.1
$region0: #{tpu_custom_call.1}
  #allocation0 [shape = 'u32[]', space=smem, size = 0x4, offset = 0x4, fixed_abs, tag = 'smem constant byte address 0x4 - core index']
  #allocation1 [shape = 'u32[72,128]{1,0:T(1,128)}', space=vmem, size = 0x9000, scoped, tag = 'internal scratch']
  %s0 = inlined_call_operand.hbm [shape: bf16[16,128], index: 0, kind: input, shape index: {}]
  %s1 = inlined_call_operand.hbm [shape: bf16[16,128], index: 1, kind: input, shape index: {}]
  %s2 = inlined_call_operand.hbm [shape: bf16[128,512], index: 2, kind: input, shape index: {}]
  %s3 = inlined_call_operand.hbm [shape: f32[1,512], index: 3, kind: input, shape index: {}]
  %s4 = inlined_call_operand.hbm [shape: bf16[128,512], index: 4, kind: input, shape index: {}]
  %s5 = inlined_call_operand.vmem [shape: f32[1,512], index: 5, kind: input, shape index: {}]
  %s6 = inlined_call_operand.hbm [shape: bf16[256,128], index: 6, kind: input, shape index: {}]
  %s7 = inlined_call_operand.vmem [shape: f32[1,128], index: 7, kind: input, shape index: {}]
  %s8 = inlined_call_operand.hbm [shape: f32[16,128], index: 8, kind: output, shape index: {}]
  %s9 = sld [smem:[#allocation0]]
  $region66: #{tpu_custom_call.1} parent=0
    _
  %s11 = ssub.s32 1, %s9
  %s12 = scalar_select 0, %s11, %s9
  $region1: #{tpu_custom_call.1} parent=0
    #allocation2 [shape = 'u8[4096]{0}', space=vmem, size = 0x1000, scoped, tag = 'input window, operand 0, single buffered']
    #allocation3 [shape = 's32[1]{0}', space=sflag, size = 0x4, scoped, tag = 'scoped memory for tpu_custom_call.1']
    #allocation4 [shape = 's32[1]{0}', space=sflag, size = 0x4, scoped, tag = 'scoped memory for tpu_custom_call.1']
    #allocation5 [shape = 'u8[4096]{0}', space=vmem, size = 0x1000, scoped, tag = 'input window, operand 1, single buffered']
    #allocation6 [shape = 's32[1]{0}', space=sflag, size = 0x4, scoped, tag = 'scoped memory for tpu_custom_call.1']
    #allocation7 [shape = 'u8[131072]{0}', space=vmem, size = 0x20000, scoped, tag = 'input window, operand 2, single buffered']
    #allocation8 [shape = 'u8[2048]{0}', space=vmem, size = 0x800, scoped, tag = 'input window, operand 3, single buffered']
    #allocation9 [shape = 's32[1]{0}', space=sflag, size = 0x4, scoped, tag = 'scoped memory for tpu_custom_call.1']
    #allocation10 [shape = 'u8[131072]{0}', space=vmem, size = 0x20000, scoped, tag = 'input window, operand 4, single buffered']
    #allocation11 [shape = 'u8[65536]{0}', space=vmem, size = 0x10000, scoped, tag = 'input window, operand 6, single buffered']
    #allocation12 [shape = 's32[1]{0}', space=sflag, size = 0x4, scoped, tag = 'scoped memory for tpu_custom_call.1']
    #allocation13 [shape = 'u8[8192]{0}', space=vmem, size = 0x2000, scoped, tag = 'output window, operand 0, single buffered']
    %13 = vsyncpa [#allocation3], 0
    %14 = vsyncpa [#allocation6], 0
    %15 = vsyncpa [#allocation9], 0
    %16 = vsyncpa [#allocation12], 0
    %17 = vsyncpa [#allocation4], 0
    // Predicated region
    $region2: #{tpu_custom_call.1} parent=1 // pred_check
      _
    $region3: #{tpu_custom_call.1} parent=1 // pred_check_branch
      %19 = sbr.rel (0) target = $region5
    $region4: #{tpu_custom_call.1} parent=1 // pred_region
      %21 = vsyncadd [#allocation3], 0
      %s22 = sshll.u32 %s0, 4
      %s23 = int_to_ptr.hbm [resolvable:$true] %s22
      %s24 = sshll.u32 [#allocation2], 4
      %s25 = int_to_ptr.vmem [resolvable:$true] %s24
      %30 = dma.hbm_to_vmem [thread:$0]  %s23, 128, %s25, [#allocation3], 64, 64, 4
    $region5: #{tpu_custom_call.1} parent=1 // pred_fallthru
      _
    // Predicated region
    $region6: #{tpu_custom_call.1} parent=1 // pred_check
      _
    $region7: #{tpu_custom_call.1} parent=1 // pred_check_branch
      %32 = sbr.rel (0) target = $region9
    $region8: #{tpu_custom_call.1} parent=1 // pred_region
      %34 = vsyncadd [#allocation6], 0
      %s35 = sshll.u32 %s1, 4
      %s36 = int_to_ptr.hbm [resolvable:$true] %s35
      %s37 = sshll.u32 [#allocation5], 4
      %s38 = int_to_ptr.vmem [resolvable:$true] %s37
      %43 = dma.hbm_to_vmem [thread:$0]  %s36, 128, %s38, [#allocation6], 64, 64, 4
    $region9: #{tpu_custom_call.1} parent=1 // pred_fallthru
      _
    // Predicated region
    $region10: #{tpu_custom_call.1} parent=1 // pred_check
      _
    $region11: #{tpu_custom_call.1} parent=1 // pred_check_branch
      %45 = sbr.rel (0) target = $region13
    $region12: #{tpu_custom_call.1} parent=1 // pred_region
      %47 = vsyncadd [#allocation6], 0
      %s48 = sshll.u32 %s2, 4
      %s49 = int_to_ptr.hbm [resolvable:$true] %s48
      %s50 = sshll.u32 [#allocation7], 4
      %s51 = int_to_ptr.vmem [resolvable:$true] %s50
      %56 = dma.hbm_to_vmem [thread:$0]  %s49, 4096, %s51, [#allocation6], 256, 256, 16
    $region13: #{tpu_custom_call.1} parent=1 // pred_fallthru
      _
    // Predicated region
    $region14: #{tpu_custom_call.1} parent=1 // pred_check
      _
    $region15: #{tpu_custom_call.1} parent=1 // pred_check_branch
      %58 = sbr.rel (0) target = $region17
    $region16: #{tpu_custom_call.1} parent=1 // pred_region
      %60 = vsyncadd [#allocation9], 0
      %s62 = sshll.u32 %s3, 4
      %s63 = int_to_ptr.hbm [resolvable:$true] %s62
      %s64 = sshll.u32 [#allocation8], 4
      %s65 = int_to_ptr.vmem [resolvable:$true] %s64
      %67 = dma.hbm_to_vmem [thread:$0]  %s63, 64, %s65, [#allocation9]
    $region17: #{tpu_custom_call.1} parent=1 // pred_fallthru
      _
    // Predicated region
    $region18: #{tpu_custom_call.1} parent=1 // pred_check
      _
    $region19: #{tpu_custom_call.1} parent=1 // pred_check_branch
      %69 = sbr.rel (0) target = $region21
    $region20: #{tpu_custom_call.1} parent=1 // pred_region
      %71 = vsyncadd [#allocation9], 0
      %s72 = sshll.u32 %s4, 4
      %s73 = int_to_ptr.hbm [resolvable:$true] %s72
      %s74 = sshll.u32 [#allocation10], 4
      %s75 = int_to_ptr.vmem [resolvable:$true] %s74
      %80 = dma.hbm_to_vmem [thread:$0]  %s73, 4096, %s75, [#allocation9], 256, 256, 16
    $region21: #{tpu_custom_call.1} parent=1 // pred_fallthru
      _
    // Predicated region
    $region22: #{tpu_custom_call.1} parent=1 // pred_check
      _
    $region23: #{tpu_custom_call.1} parent=1 // pred_check_branch
      %82 = sbr.rel (0) target = $region25
    $region24: #{tpu_custom_call.1} parent=1 // pred_region
      _
    $region25: #{tpu_custom_call.1} parent=1 // pred_fallthru
      _
    // Predicated region
    $region26: #{tpu_custom_call.1} parent=1 // pred_check
      _
    $region27: #{tpu_custom_call.1} parent=1 // pred_check_branch
      %84 = sbr.rel (0) target = $region29
    $region28: #{tpu_custom_call.1} parent=1 // pred_region
      %86 = vsyncadd [#allocation12], 0
      %s87 = sshll.u32 %s6, 4
      %s88 = int_to_ptr.hbm [resolvable:$true] %s87
      %s89 = sshll.u32 [#allocation11], 4
      %s90 = int_to_ptr.vmem [resolvable:$true] %s89
      %95 = dma.hbm_to_vmem [thread:$0]  %s88, 2048, %s90, [#allocation12], 64, 64, 4
    $region29: #{tpu_custom_call.1} parent=1 // pred_fallthru
      _
    // Predicated region
    $region30: #{tpu_custom_call.1} parent=1 // pred_check
      _
    $region31: #{tpu_custom_call.1} parent=1 // pred_check_branch
      %97 = sbr.rel (0) target = $region33
    $region32: #{tpu_custom_call.1} parent=1 // pred_region
      _
    $region33: #{tpu_custom_call.1} parent=1 // pred_fallthru
      _
    // Predicated region
    $region34: #{tpu_custom_call.1} parent=1 // pred_check
      _
    $region35: #{tpu_custom_call.1} parent=1 // pred_check_branch
      %99 = sbr.rel (0) target = $region37
    $region36: #{tpu_custom_call.1} parent=1 // pred_region
      %101 = dma.done [#allocation3], 128
    $region37: #{tpu_custom_call.1} parent=1 // pred_fallthru
      _
    // Predicated region
    $region38: #{tpu_custom_call.1} parent=1 // pred_check
      _
    $region39: #{tpu_custom_call.1} parent=1 // pred_check_branch
      %103 = sbr.rel (0) target = $region41
    $region40: #{tpu_custom_call.1} parent=1 // pred_region
      %105 = dma.done [#allocation6], 128
    $region41: #{tpu_custom_call.1} parent=1 // pred_fallthru
      _
    // Predicated region
    $region42: #{tpu_custom_call.1} parent=1 // pred_check
      _
    $region43: #{tpu_custom_call.1} parent=1 // pred_check_branch
      %107 = sbr.rel (0) target = $region45
    $region44: #{tpu_custom_call.1} parent=1 // pred_region
      %109 = dma.done [#allocation6], 4096
    $region45: #{tpu_custom_call.1} parent=1 // pred_fallthru
      _
    // Predicated region
    $region46: #{tpu_custom_call.1} parent=1 // pred_check
      _
    $region47: #{tpu_custom_call.1} parent=1 // pred_check_branch
      %111 = sbr.rel (0) target = $region49
    $region48: #{tpu_custom_call.1} parent=1 // pred_region
      %113 = dma.done [#allocation9], 64
    $region49: #{tpu_custom_call.1} parent=1 // pred_fallthru
      _
    // Predicated region
    $region50: #{tpu_custom_call.1} parent=1 // pred_check
      _
    $region51: #{tpu_custom_call.1} parent=1 // pred_check_branch
      %115 = sbr.rel (0) target = $region53
    $region52: #{tpu_custom_call.1} parent=1 // pred_region
      %117 = dma.done [#allocation9], 4096
    $region53: #{tpu_custom_call.1} parent=1 // pred_fallthru
      _
    // Predicated region
    $region54: #{tpu_custom_call.1} parent=1 // pred_check
      _
    $region55: #{tpu_custom_call.1} parent=1 // pred_check_branch
      %119 = sbr.rel (0) target = $region57
    $region56: #{tpu_custom_call.1} parent=1 // pred_region
      %121 = dma.done [#allocation12], 2048
    $region57: #{tpu_custom_call.1} parent=1 // pred_fallthru
      _
    %v122 = vld [vmem:[#allocation2] sm:$0xf]
    %v123 = vld [vmem:[#allocation2 + $0x4] sm:$0xf]
    %v124 = vld [vmem:[#allocation5] sm:$0xf]
    %v125 = vld [vmem:[#allocation5 + $0x4] sm:$0xf]
    %v126 = vld [vmem:[#allocation7] sm:$0xff]
    %v127 = vld [vmem:[#allocation7 + $0x8] sm:$0xff]
    %v128 = vld [vmem:[#allocation7 + $0x10] sm:$0xff]
    %v129 = vld [vmem:[#allocation7 + $0x18] sm:$0xff]
    %v130 = vld [vmem:[#allocation7 + $0x20] sm:$0xff]
    %v131 = vld [vmem:[#allocation7 + $0x28] sm:$0xff]
    %v132 = vld [vmem:[#allocation7 + $0x30] sm:$0xff]
    %v133 = vld [vmem:[#allocation7 + $0x38] sm:$0xff]
    %v134 = vld [vmem:[#allocation7 + $0x40] sm:$0xff]
    %v135 = vld [vmem:[#allocation7 + $0x48] sm:$0xff]
    %v136 = vld [vmem:[#allocation7 + $0x50] sm:$0xff]
    %v137 = vld [vmem:[#allocation7 + $0x58] sm:$0xff]
    %v138 = vld [vmem:[#allocation7 + $0x60] sm:$0xff]
    %v139 = vld [vmem:[#allocation7 + $0x68] sm:$0xff]
    %v140 = vld [vmem:[#allocation7 + $0x70] sm:$0xff]
    %v141 = vld [vmem:[#allocation7 + $0x78] sm:$0xff]
    %v142 = vld [vmem:[#allocation7 + $0x80] sm:$0xff]
    %v143 = vld [vmem:[#allocation7 + $0x88] sm:$0xff]
    %v144 = vld [vmem:[#allocation7 + $0x90] sm:$0xff]
    %v145 = vld [vmem:[#allocation7 + $0x98] sm:$0xff]
    %v146 = vld [vmem:[#allocation7 + $0xa0] sm:$0xff]
    %v147 = vld [vmem:[#allocation7 + $0xa8] sm:$0xff]
    %v148 = vld [vmem:[#allocation7 + $0xb0] sm:$0xff]
    %v149 = vld [vmem:[#allocation7 + $0xb8] sm:$0xff]
    %v150 = vld [vmem:[#allocation7 + $0xc0] sm:$0xff]
    %v151 = vld [vmem:[#allocation7 + $0xc8] sm:$0xff]
    %v152 = vld [vmem:[#allocation7 + $0xd0] sm:$0xff]
    %v153 = vld [vmem:[#allocation7 + $0xd8] sm:$0xff]
    %v154 = vld [vmem:[#allocation7 + $0xe0] sm:$0xff]
    %v155 = vld [vmem:[#allocation7 + $0xe8] sm:$0xff]
    %v156 = vld [vmem:[#allocation7 + $0xf0] sm:$0xff]
    %v157 = vld [vmem:[#allocation7 + $0xf8] sm:$0xff]
    %v158 = vld [vmem:[#allocation8] sm:$0xf]
    %v160 = vperm.slane %v158, 0
    %v161 = vperm.slane %v158, 1
    %v162 = vperm.slane %v158, 2
    %v163 = vperm.slane %v158, 3
    %v170 = vunpack.c.l.b16 %v122
    %v171 = vunpack.c.l.b16 %v123
    %v172 = vpack.c.b16 %v171, %v170
    %v206 = vunpack.c.l.b16 %v126
    %v207 = vunpack.c.h.b16 %v126
    %v208 = vunpack.c.l.b16 %v127
    %v209 = vunpack.c.h.b16 %v127
    %v210 = vunpack.c.l.b16 %v128
    %v211 = vunpack.c.h.b16 %v128
    %v212 = vunpack.c.l.b16 %v129
    %v213 = vunpack.c.h.b16 %v129
    %v214 = vunpack.c.l.b16 %v130
    %v215 = vunpack.c.h.b16 %v130
    %v216 = vunpack.c.l.b16 %v131
    %v217 = vunpack.c.h.b16 %v131
    %v218 = vunpack.c.l.b16 %v132
    %v219 = vunpack.c.h.b16 %v132
    %v220 = vunpack.c.l.b16 %v133
    %v221 = vunpack.c.h.b16 %v133
    %v222 = vunpack.c.l.b16 %v134
    %v223 = vunpack.c.h.b16 %v134
    %v224 = vunpack.c.l.b16 %v135
    %v225 = vunpack.c.h.b16 %v135
    %v226 = vunpack.c.l.b16 %v136
    %v227 = vunpack.c.h.b16 %v136
    %v228 = vunpack.c.l.b16 %v137
    %v229 = vunpack.c.h.b16 %v137
    %v230 = vunpack.c.l.b16 %v138
    %v231 = vunpack.c.h.b16 %v138
    %v232 = vunpack.c.l.b16 %v139
    %v233 = vunpack.c.h.b16 %v139
    %v234 = vunpack.c.l.b16 %v140
    %v235 = vunpack.c.h.b16 %v140
    %v236 = vunpack.c.l.b16 %v141
    %v237 = vunpack.c.h.b16 %v141
    %v238 = vunpack.c.l.b16 %v142
    %v239 = vunpack.c.h.b16 %v142
    %v240 = vunpack.c.l.b16 %v143
    %v241 = vunpack.c.h.b16 %v143
    %v242 = vunpack.c.l.b16 %v144
    %v243 = vunpack.c.h.b16 %v144
    %v244 = vunpack.c.l.b16 %v145
    %v245 = vunpack.c.h.b16 %v145
    %v246 = vunpack.c.l.b16 %v146
    %v247 = vunpack.c.h.b16 %v146
    %v248 = vunpack.c.l.b16 %v147
    %v249 = vunpack.c.h.b16 %v147
    %v250 = vunpack.c.l.b16 %v148
    %v251 = vunpack.c.h.b16 %v148
    %v252 = vunpack.c.l.b16 %v149
    %v253 = vunpack.c.h.b16 %v149
    %v254 = vunpack.c.l.b16 %v150
    %v255 = vunpack.c.h.b16 %v150
    %v256 = vunpack.c.l.b16 %v151
    %v257 = vunpack.c.h.b16 %v151
    %v258 = vunpack.c.l.b16 %v152
    %v259 = vunpack.c.h.b16 %v152
    %v260 = vunpack.c.l.b16 %v153
    %v261 = vunpack.c.h.b16 %v153
    %v262 = vunpack.c.l.b16 %v154
    %v263 = vunpack.c.h.b16 %v154
    %v264 = vunpack.c.l.b16 %v155
    %v265 = vunpack.c.h.b16 %v155
    %v266 = vunpack.c.l.b16 %v156
    %v267 = vunpack.c.h.b16 %v156
    %v268 = vunpack.c.l.b16 %v157
    %v269 = vunpack.c.h.b16 %v157
    %v270 = vpack.c.b16 %v210, %v206
    %v271 = vpack.c.b16 %v211, %v207
    %v272 = vpack.c.b16 %v212, %v208
    %v273 = vpack.c.b16 %v213, %v209
    %v274 = vpack.c.b16 %v218, %v214
    %v275 = vpack.c.b16 %v219, %v215
    %v276 = vpack.c.b16 %v220, %v216
    %v277 = vpack.c.b16 %v221, %v217
    %v278 = vpack.c.b16 %v226, %v222
    %v279 = vpack.c.b16 %v227, %v223
    %v280 = vpack.c.b16 %v228, %v224
    %v281 = vpack.c.b16 %v229, %v225
    %v282 = vpack.c.b16 %v234, %v230
    %v283 = vpack.c.b16 %v235, %v231
    %v284 = vpack.c.b16 %v236, %v232
    %v285 = vpack.c.b16 %v237, %v233
    %v286 = vpack.c.b16 %v242, %v238
    %v287 = vpack.c.b16 %v243, %v239
    %v288 = vpack.c.b16 %v244, %v240
    %v289 = vpack.c.b16 %v245, %v241
    %v290 = vpack.c.b16 %v250, %v246
    %v291 = vpack.c.b16 %v251, %v247
    %v292 = vpack.c.b16 %v252, %v248
    %v293 = vpack.c.b16 %v253, %v249
    %v294 = vpack.c.b16 %v258, %v254
    %v295 = vpack.c.b16 %v259, %v255
    %v296 = vpack.c.b16 %v260, %v256
    %v297 = vpack.c.b16 %v261, %v257
    %v298 = vpack.c.b16 %v266, %v262
    %v299 = vpack.c.b16 %v267, %v263
    %v300 = vpack.c.b16 %v268, %v264
    %v301 = vpack.c.b16 %v269, %v265
    %334 = vmatpush.bf16.msra.mxu0 %v298
    %335 = vmatpush.bf16.msra.mxu0 %v294
    %336 = vmatpush.bf16.msra.mxu0 %v290
    %337 = vmatpush.bf16.msra.mxu0 %v286
    %338 = vmatpush.bf16.msra.mxu0 %v282
    %339 = vmatpush.bf16.msra.mxu0 %v278
    %340 = vmatpush.bf16.msra.mxu0 %v274
    %341 = vmatpush.bf16.msra.mxu0 %v270
    %342 = vmatmul.bf16.gmra.mxu0 %v172
    %v343 = vpop.f32.mrf.mxu0
    %v344 = vadd.f32 %v160, %v343
    %v345 = vpop.f32.mrf.mxu0
    %v346 = vadd.f32 %v160, %v345
    %347 = vdwg.mxu0
    %348 = vmatpush.bf16.msra.mxu0 %v299
    %349 = vmatpush.bf16.msra.mxu0 %v295
    %350 = vmatpush.bf16.msra.mxu0 %v291
    %351 = vmatpush.bf16.msra.mxu0 %v287
    %352 = vmatpush.bf16.msra.mxu0 %v283
    %353 = vmatpush.bf16.msra.mxu0 %v279
    %354 = vmatpush.bf16.msra.mxu0 %v275
    %355 = vmatpush.bf16.msra.mxu0 %v271
    %356 = vmatmul.bf16.gmra.mxu0 %v172
    %v357 = vpop.f32.mrf.mxu0
    %v358 = vadd.f32 %v161, %v357
    %v359 = vpop.f32.mrf.mxu0
    %v360 = vadd.f32 %v161, %v359
    %361 = vdwg.mxu0
    %362 = vmatpush.bf16.msra.mxu0 %v300
    %363 = vmatpush.bf16.msra.mxu0 %v296
    %364 = vmatpush.bf16.msra.mxu0 %v292
    %365 = vmatpush.bf16.msra.mxu0 %v288
    %366 = vmatpush.bf16.msra.mxu0 %v284
    %367 = vmatpush.bf16.msra.mxu0 %v280
    %368 = vmatpush.bf16.msra.mxu0 %v276
    %369 = vmatpush.bf16.msra.mxu0 %v272
    %370 = vmatmul.bf16.gmra.mxu0 %v172
    %v371 = vpop.f32.mrf.mxu0
    %v372 = vadd.f32 %v162, %v371
    %v373 = vpop.f32.mrf.mxu0
    %v374 = vadd.f32 %v162, %v373
    %375 = vdwg.mxu0
    %376 = vmatpush.bf16.msra.mxu0 %v301
    %377 = vmatpush.bf16.msra.mxu0 %v297
    %378 = vmatpush.bf16.msra.mxu0 %v293
    %379 = vmatpush.bf16.msra.mxu0 %v289
    %380 = vmatpush.bf16.msra.mxu0 %v285
    %381 = vmatpush.bf16.msra.mxu0 %v281
    %382 = vmatpush.bf16.msra.mxu0 %v277
    %383 = vmatpush.bf16.msra.mxu0 %v273
    %384 = vmatmul.bf16.gmra.mxu0 %v172
    %v385 = vpop.f32.mrf.mxu0
    %v386 = vadd.f32 %v163, %v385
    %v387 = vpop.f32.mrf.mxu0
    %v388 = vadd.f32 %v163, %v387
    %389 = vdwg.mxu0
    %v390 = vmax.f32 %v344, 0.0
    %v391 = vmax.f32 %v358, 0.0
    %v392 = vmax.f32 %v372, 0.0
    %v393 = vmax.f32 %v386, 0.0
    %v394 = vmax.f32 %v346, 0.0
    %v395 = vmax.f32 %v360, 0.0
    %v396 = vmax.f32 %v374, 0.0
    %v397 = vmax.f32 %v388, 0.0
    %v398 = vld [vmem:[#allocation10] sm:$0xff]
    %v399 = vld [vmem:[#allocation10 + $0x8] sm:$0xff]
    %v400 = vld [vmem:[#allocation10 + $0x10] sm:$0xff]
    %v401 = vld [vmem:[#allocation10 + $0x18] sm:$0xff]
    %v402 = vld [vmem:[#allocation10 + $0x20] sm:$0xff]
    %v403 = vld [vmem:[#allocation10 + $0x28] sm:$0xff]
    %v404 = vld [vmem:[#allocation10 + $0x30] sm:$0xff]
    %v405 = vld [vmem:[#allocation10 + $0x38] sm:$0xff]
    %v406 = vld [vmem:[#allocation10 + $0x40] sm:$0xff]
    %v407 = vld [vmem:[#allocation10 + $0x48] sm:$0xff]
    %v408 = vld [vmem:[#allocation10 + $0x50] sm:$0xff]
    %v409 = vld [vmem:[#allocation10 + $0x58] sm:$0xff]
    %v410 = vld [vmem:[#allocation10 + $0x60] sm:$0xff]
    %v411 = vld [vmem:[#allocation10 + $0x68] sm:$0xff]
    %v412 = vld [vmem:[#allocation10 + $0x70] sm:$0xff]
    %v413 = vld [vmem:[#allocation10 + $0x78] sm:$0xff]
    %v414 = vld [vmem:[#allocation10 + $0x80] sm:$0xff]
    %v415 = vld [vmem:[#allocation10 + $0x88] sm:$0xff]
    %v416 = vld [vmem:[#allocation10 + $0x90] sm:$0xff]
    %v417 = vld [vmem:[#allocation10 + $0x98] sm:$0xff]
    %v418 = vld [vmem:[#allocation10 + $0xa0] sm:$0xff]
    %v419 = vld [vmem:[#allocation10 + $0xa8] sm:$0xff]
    %v420 = vld [vmem:[#allocation10 + $0xb0] sm:$0xff]
    %v421 = vld [vmem:[#allocation10 + $0xb8] sm:$0xff]
    %v422 = vld [vmem:[#allocation10 + $0xc0] sm:$0xff]
    %v423 = vld [vmem:[#allocation10 + $0xc8] sm:$0xff]
    %v424 = vld [vmem:[#allocation10 + $0xd0] sm:$0xff]
    %v425 = vld [vmem:[#allocation10 + $0xd8] sm:$0xff]
    %v426 = vld [vmem:[#allocation10 + $0xe0] sm:$0xff]
    %v427 = vld [vmem:[#allocation10 + $0xe8] sm:$0xff]
    %v428 = vld [vmem:[#allocation10 + $0xf0] sm:$0xff]
    %v429 = vld [vmem:[#allocation10 + $0xf8] sm:$0xff]
    %v430 = vld [vmem:[%s5] sm:$0xf]
    %v432 = vperm.slane %v430, 0
    %v433 = vperm.slane %v430, 1
    %v434 = vperm.slane %v430, 2
    %v435 = vperm.slane %v430, 3
    %v442 = vunpack.c.l.b16 %v124
    %v443 = vunpack.c.l.b16 %v125
    %v444 = vpack.c.b16 %v443, %v442
    %v478 = vunpack.c.l.b16 %v398
    %v479 = vunpack.c.h.b16 %v398
    %v480 = vunpack.c.l.b16 %v399
    %v481 = vunpack.c.h.b16 %v399
    %v482 = vunpack.c.l.b16 %v400
    %v483 = vunpack.c.h.b16 %v400
    %v484 = vunpack.c.l.b16 %v401
    %v485 = vunpack.c.h.b16 %v401
    %v486 = vunpack.c.l.b16 %v402
    %v487 = vunpack.c.h.b16 %v402
    %v488 = vunpack.c.l.b16 %v403
    %v489 = vunpack.c.h.b16 %v403
    %v490 = vunpack.c.l.b16 %v404
    %v491 = vunpack.c.h.b16 %v404
    %v492 = vunpack.c.l.b16 %v405
    %v493 = vunpack.c.h.b16 %v405
    %v494 = vunpack.c.l.b16 %v406
    %v495 = vunpack.c.h.b16 %v406
    %v496 = vunpack.c.l.b16 %v407
    %v497 = vunpack.c.h.b16 %v407
    %v498 = vunpack.c.l.b16 %v408
    %v499 = vunpack.c.h.b16 %v408
    %v500 = vunpack.c.l.b16 %v409
    %v501 = vunpack.c.h.b16 %v409
    %v502 = vunpack.c.l.b16 %v410
    %v503 = vunpack.c.h.b16 %v410
    %v504 = vunpack.c.l.b16 %v411
    %v505 = vunpack.c.h.b16 %v411
    %v506 = vunpack.c.l.b16 %v412
    %v507 = vunpack.c.h.b16 %v412
    %v508 = vunpack.c.l.b16 %v413
    %v509 = vunpack.c.h.b16 %v413
    %v510 = vunpack.c.l.b16 %v414
    %v511 = vunpack.c.h.b16 %v414
    %v512 = vunpack.c.l.b16 %v415
    %v513 = vunpack.c.h.b16 %v415
    %v514 = vunpack.c.l.b16 %v416
    %v515 = vunpack.c.h.b16 %v416
    %v516 = vunpack.c.l.b16 %v417
    %v517 = vunpack.c.h.b16 %v417
    %v518 = vunpack.c.l.b16 %v418
    %v519 = vunpack.c.h.b16 %v418
    %v520 = vunpack.c.l.b16 %v419
    %v521 = vunpack.c.h.b16 %v419
    %v522 = vunpack.c.l.b16 %v420
    %v523 = vunpack.c.h.b16 %v420
    %v524 = vunpack.c.l.b16 %v421
    %v525 = vunpack.c.h.b16 %v421
    %v526 = vunpack.c.l.b16 %v422
    %v527 = vunpack.c.h.b16 %v422
    %v528 = vunpack.c.l.b16 %v423
    %v529 = vunpack.c.h.b16 %v423
    %v530 = vunpack.c.l.b16 %v424
    %v531 = vunpack.c.h.b16 %v424
    %v532 = vunpack.c.l.b16 %v425
    %v533 = vunpack.c.h.b16 %v425
    %v534 = vunpack.c.l.b16 %v426
    %v535 = vunpack.c.h.b16 %v426
    %v536 = vunpack.c.l.b16 %v427
    %v537 = vunpack.c.h.b16 %v427
    %v538 = vunpack.c.l.b16 %v428
    %v539 = vunpack.c.h.b16 %v428
    %v540 = vunpack.c.l.b16 %v429
    %v541 = vunpack.c.h.b16 %v429
    %v542 = vpack.c.b16 %v482, %v478
    %v543 = vpack.c.b16 %v483, %v479
    %v544 = vpack.c.b16 %v484, %v480
    %v545 = vpack.c.b16 %v485, %v481
    %v546 = vpack.c.b16 %v490, %v486
    %v547 = vpack.c.b16 %v491, %v487
    %v548 = vpack.c.b16 %v492, %v488
    %v549 = vpack.c.b16 %v493, %v489
    %v550 = vpack.c.b16 %v498, %v494
    %v551 = vpack.c.b16 %v499, %v495
    %v552 = vpack.c.b16 %v500, %v496
    %v553 = vpack.c.b16 %v501, %v497
    %v554 = vpack.c.b16 %v506, %v502
    %v555 = vpack.c.b16 %v507, %v503
    %v556 = vpack.c.b16 %v508, %v504
    %v557 = vpack.c.b16 %v509, %v505
    %v558 = vpack.c.b16 %v514, %v510
    %v559 = vpack.c.b16 %v515, %v511
    %v560 = vpack.c.b16 %v516, %v512
    %v561 = vpack.c.b16 %v517, %v513
    %v562 = vpack.c.b16 %v522, %v518
    %v563 = vpack.c.b16 %v523, %v519
    %v564 = vpack.c.b16 %v524, %v520
    %v565 = vpack.c.b16 %v525, %v521
    %v566 = vpack.c.b16 %v530, %v526
    %v567 = vpack.c.b16 %v531, %v527
    %v568 = vpack.c.b16 %v532, %v528
    %v569 = vpack.c.b16 %v533, %v529
    %v570 = vpack.c.b16 %v538, %v534
    %v571 = vpack.c.b16 %v539, %v535
    %v572 = vpack.c.b16 %v540, %v536
    %v573 = vpack.c.b16 %v541, %v537
    %606 = vmatpush.bf16.msra.mxu0 %v570
    %607 = vmatpush.bf16.msra.mxu0 %v566
    %608 = vmatpush.bf16.msra.mxu0 %v562
    %609 = vmatpush.bf16.msra.mxu0 %v558
    %610 = vmatpush.bf16.msra.mxu0 %v554
    %611 = vmatpush.bf16.msra.mxu0 %v550
    %612 = vmatpush.bf16.msra.mxu0 %v546
    %613 = vmatpush.bf16.msra.mxu0 %v542
    %614 = vmatmul.bf16.gmra.mxu0 %v444
    %v615 = vpop.f32.mrf.mxu0
    %v616 = vadd.f32 %v432, %v615
    %v617 = vpop.f32.mrf.mxu0
    %v618 = vadd.f32 %v432, %v617
    %619 = vdwg.mxu0
    %620 = vmatpush.bf16.msra.mxu0 %v571
    %621 = vmatpush.bf16.msra.mxu0 %v567
    %622 = vmatpush.bf16.msra.mxu0 %v563
    %623 = vmatpush.bf16.msra.mxu0 %v559
    %624 = vmatpush.bf16.msra.mxu0 %v555
    %625 = vmatpush.bf16.msra.mxu0 %v551
    %626 = vmatpush.bf16.msra.mxu0 %v547
    %627 = vmatpush.bf16.msra.mxu0 %v543
    %628 = vmatmul.bf16.gmra.mxu0 %v444
    %v629 = vpop.f32.mrf.mxu0
    %v630 = vadd.f32 %v433, %v629
    %v631 = vpop.f32.mrf.mxu0
    %v632 = vadd.f32 %v433, %v631
    %633 = vdwg.mxu0
    %634 = vmatpush.bf16.msra.mxu0 %v572
    %635 = vmatpush.bf16.msra.mxu0 %v568
    %636 = vmatpush.bf16.msra.mxu0 %v564
    %637 = vmatpush.bf16.msra.mxu0 %v560
    %638 = vmatpush.bf16.msra.mxu0 %v556
    %639 = vmatpush.bf16.msra.mxu0 %v552
    %640 = vmatpush.bf16.msra.mxu0 %v548
    %641 = vmatpush.bf16.msra.mxu0 %v544
    %642 = vmatmul.bf16.gmra.mxu0 %v444
    %v643 = vpop.f32.mrf.mxu0
    %v644 = vadd.f32 %v434, %v643
    %v645 = vpop.f32.mrf.mxu0
    %v646 = vadd.f32 %v434, %v645
    %647 = vdwg.mxu0
    %648 = vmatpush.bf16.msra.mxu0 %v573
    %649 = vmatpush.bf16.msra.mxu0 %v569
    %650 = vmatpush.bf16.msra.mxu0 %v565
    %651 = vmatpush.bf16.msra.mxu0 %v561
    %652 = vmatpush.bf16.msra.mxu0 %v557
    %653 = vmatpush.bf16.msra.mxu0 %v553
    %654 = vmatpush.bf16.msra.mxu0 %v549
    %655 = vmatpush.bf16.msra.mxu0 %v545
    %656 = vmatmul.bf16.gmra.mxu0 %v444
    %v657 = vpop.f32.mrf.mxu0
    %v658 = vadd.f32 %v435, %v657
    %v659 = vpop.f32.mrf.mxu0
    %v660 = vadd.f32 %v435, %v659
    %661 = vdwg.mxu0
    %v662 = vmax.f32 %v616, 0.0
    %v663 = vmax.f32 %v630, 0.0
    %v664 = vmax.f32 %v644, 0.0
    %v665 = vmax.f32 %v658, 0.0
    %v666 = vmax.f32 %v618, 0.0
    %v667 = vmax.f32 %v632, 0.0
    %v668 = vmax.f32 %v646, 0.0
    %v669 = vmax.f32 %v660, 0.0
    %v670 = vmul.f32 %v390, %v662
    %v671 = vmul.f32 %v391, %v663
    %v672 = vmul.f32 %v394, %v666
    %v673 = vmul.f32 %v395, %v667
    %v674 = vmul.f32 %v392, %v664
    %v675 = vmul.f32 %v393, %v665
    %v676 = vmul.f32 %v396, %v668
    %v677 = vmul.f32 %v397, %v669
    %v678 = vmul.f32 %v674, %v670
    %v679 = vmul.f32 %v675, %v671
    %v680 = vmul.f32 %v676, %v672
    %v681 = vmul.f32 %v677, %v673
    %v682 = vadd.f32 %v670, %v671
    %v683 = vadd.f32 %v672, %v673
    %v684 = vadd.f32 %v678, %v679
    %v685 = vadd.f32 %v680, %v681
    %v686 = vpack.c.bf16 %v683, %v682
    %v687 = vpack.c.bf16 %v685, %v684
    %v688 = vld [vmem:[#allocation11] sm:$0xf]
    %v689 = vld [vmem:[#allocation11 + $0x4] sm:$0xf]
    %v690 = vld [vmem:[#allocation11 + $0x8] sm:$0xf]
    %v691 = vld [vmem:[#allocation11 + $0xc] sm:$0xf]
    %v692 = vld [vmem:[#allocation11 + $0x10] sm:$0xf]
    %v693 = vld [vmem:[#allocation11 + $0x14] sm:$0xf]
    %v694 = vld [vmem:[#allocation11 + $0x18] sm:$0xf]
    %v695 = vld [vmem:[#allocation11 + $0x1c] sm:$0xf]
    %v696 = vld [vmem:[#allocation11 + $0x20] sm:$0xf]
    %v697 = vld [vmem:[#allocation11 + $0x24] sm:$0xf]
    %v698 = vld [vmem:[#allocation11 + $0x28] sm:$0xf]
    %v699 = vld [vmem:[#allocation11 + $0x2c] sm:$0xf]
    %v700 = vld [vmem:[#allocation11 + $0x30] sm:$0xf]
    %v701 = vld [vmem:[#allocation11 + $0x34] sm:$0xf]
    %v702 = vld [vmem:[#allocation11 + $0x38] sm:$0xf]
    %v703 = vld [vmem:[#allocation11 + $0x3c] sm:$0xf]
    %v704 = vld [vmem:[#allocation11 + $0x40] sm:$0xf]
    %v705 = vld [vmem:[#allocation11 + $0x44] sm:$0xf]
    %v706 = vld [vmem:[#allocation11 + $0x48] sm:$0xf]
    %v707 = vld [vmem:[#allocation11 + $0x4c] sm:$0xf]
    %v708 = vld [vmem:[#allocation11 + $0x50] sm:$0xf]
    %v709 = vld [vmem:[#allocation11 + $0x54] sm:$0xf]
    %v710 = vld [vmem:[#allocation11 + $0x58] sm:$0xf]
    %v711 = vld [vmem:[#allocation11 + $0x5c] sm:$0xf]
    %v712 = vld [vmem:[#allocation11 + $0x60] sm:$0xf]
    %v713 = vld [vmem:[#allocation11 + $0x64] sm:$0xf]
    %v714 = vld [vmem:[#allocation11 + $0x68] sm:$0xf]
    %v715 = vld [vmem:[#allocation11 + $0x6c] sm:$0xf]
    %v716 = vld [vmem:[#allocation11 + $0x70] sm:$0xf]
    %v717 = vld [vmem:[#allocation11 + $0x74] sm:$0xf]
    %v718 = vld [vmem:[#allocation11 + $0x78] sm:$0xf]
    %v719 = vld [vmem:[#allocation11 + $0x7c] sm:$0xf]
    %v720 = vld [vmem:[%s7] sm:$0x1]
    %v722 = vperm.slane %v720, 0
    %v756 = vunpack.c.l.b16 %v688
    %v757 = vunpack.c.l.b16 %v689
    %v758 = vunpack.c.l.b16 %v690
    %v759 = vunpack.c.l.b16 %v691
    %v760 = vunpack.c.l.b16 %v692
    %v761 = vunpack.c.l.b16 %v693
    %v762 = vunpack.c.l.b16 %v694
    %v763 = vunpack.c.l.b16 %v695
    %v764 = vunpack.c.l.b16 %v696
    %v765 = vunpack.c.l.b16 %v697
    %v766 = vunpack.c.l.b16 %v698
    %v767 = vunpack.c.l.b16 %v699
    %v768 = vunpack.c.l.b16 %v700
    %v769 = vunpack.c.l.b16 %v701
    %v770 = vunpack.c.l.b16 %v702
    %v771 = vunpack.c.l.b16 %v703
    %v772 = vunpack.c.l.b16 %v704
    %v773 = vunpack.c.l.b16 %v705
    %v774 = vunpack.c.l.b16 %v706
    %v775 = vunpack.c.l.b16 %v707
    %v776 = vunpack.c.l.b16 %v708
    %v777 = vunpack.c.l.b16 %v709
    %v778 = vunpack.c.l.b16 %v710
    %v779 = vunpack.c.l.b16 %v711
    %v780 = vunpack.c.l.b16 %v712
    %v781 = vunpack.c.l.b16 %v713
    %v782 = vunpack.c.l.b16 %v714
    %v783 = vunpack.c.l.b16 %v715
    %v784 = vunpack.c.l.b16 %v716
    %v785 = vunpack.c.l.b16 %v717
    %v786 = vunpack.c.l.b16 %v718
    %v787 = vunpack.c.l.b16 %v719
    %v788 = vpack.c.b16 %v757, %v756
    %v789 = vpack.c.b16 %v759, %v758
    %v790 = vpack.c.b16 %v761, %v760
    %v791 = vpack.c.b16 %v763, %v762
    %v792 = vpack.c.b16 %v765, %v764
    %v793 = vpack.c.b16 %v767, %v766
    %v794 = vpack.c.b16 %v769, %v768
    %v795 = vpack.c.b16 %v771, %v770
    %v796 = vpack.c.b16 %v773, %v772
    %v797 = vpack.c.b16 %v775, %v774
    %v798 = vpack.c.b16 %v777, %v776
    %v799 = vpack.c.b16 %v779, %v778
    %v800 = vpack.c.b16 %v781, %v780
    %v801 = vpack.c.b16 %v783, %v782
    %v802 = vpack.c.b16 %v785, %v784
    %v803 = vpack.c.b16 %v787, %v786
    %820 = vmatpush.bf16.msra.mxu0 %v795
    %821 = vmatpush.bf16.msra.mxu0 %v794
    %822 = vmatpush.bf16.msra.mxu0 %v793
    %823 = vmatpush.bf16.msra.mxu0 %v792
    %824 = vmatpush.bf16.msra.mxu0 %v791
    %825 = vmatpush.bf16.msra.mxu0 %v790
    %826 = vmatpush.bf16.msra.mxu0 %v789
    %827 = vmatpush.bf16.msra.mxu0 %v788
    %828 = vmatmul.bf16.gmra.mxu0 %v686
    %v829 = vpop.f32.mrf.mxu0
    %v830 = vadd.f32 %v722, %v829
    %v831 = vpop.f32.mrf.mxu0
    %v832 = vadd.f32 %v722, %v831
    %833 = vdwg.mxu0
    %834 = vmatpush.bf16.msra.mxu0 %v803
    %835 = vmatpush.bf16.msra.mxu0 %v802
    %836 = vmatpush.bf16.msra.mxu0 %v801
    %837 = vmatpush.bf16.msra.mxu0 %v800
    %838 = vmatpush.bf16.msra.mxu0 %v799
    %839 = vmatpush.bf16.msra.mxu0 %v798
    %840 = vmatpush.bf16.msra.mxu0 %v797
    %841 = vmatpush.bf16.msra.mxu0 %v796
    %842 = vmatmul.bf16.gmra.mxu0 %v687
    %v843 = vpop.f32.mrf.mxu0
    %v844 = vadd.f32 %v830, %v843
    %v845 = vpop.f32.mrf.mxu0
    %v846 = vadd.f32 %v832, %v845
    %847 = vdwg.mxu0
    %v848 = vmax.f32 %v844, 0.0
    %v849 = vmax.f32 %v846, 0.0
    %850 = vst [vmem:[#allocation13] sm:$0xff] %v848
    %851 = vst [vmem:[#allocation13 + $0x8] sm:$0xff] %v849
    // Predicated region
    $region58: #{tpu_custom_call.1} parent=1 // pred_check
      _
    $region59: #{tpu_custom_call.1} parent=1 // pred_check_branch
      %853 = sbr.rel (0) target = $region61
    $region60: #{tpu_custom_call.1} parent=1 // pred_region
      %855 = vsyncadd [#allocation4], 0
      %s856 = sshll.u32 [#allocation13], 4
      %s857 = int_to_ptr.vmem [resolvable:$true] %s856
      %s858 = sshll.u32 %s8, 4
      %s859 = int_to_ptr.hbm [resolvable:$true] %s858
      %864 = dma.vmem_to_hbm [thread:$0]  %s857, 256, %s859, [#allocation4], 128, 128, 8
    $region61: #{tpu_custom_call.1} parent=1 // pred_fallthru
      _
    // Predicated region
    $region62: #{tpu_custom_call.1} parent=1 // pred_check
      _
    $region63: #{tpu_custom_call.1} parent=1 // pred_check_branch
      %866 = sbr.rel (0) target = $region65
    $region64: #{tpu_custom_call.1} parent=1 // pred_region
      %868 = dma.done [#allocation4], 256
    $region65: #{tpu_custom_call.1} parent=1 // pred_fallthru
      _
    %869 = vsyncpa [#allocation3], 1
    %870 = vsyncpa [#allocation6], 1
    %871 = vsyncpa [#allocation9], 1
    %872 = vsyncpa [#allocation12], 1
    %873 = vsyncpa [#allocation4], 1

// kernel: tpu_custom_call.1
$region0: #{tpu_custom_call.1}
  #allocation0 [shape = 'u32[]', space=smem, size = 0x4, offset = 0x4, fixed_abs, tag = 'smem constant byte address 0x4 - core index']
  #allocation1 [shape = 'u32[72,128]{1,0:T(1,128)}', space=vmem, size = 0x9000, scoped, tag = 'internal scratch']
  %s0 = inlined_call_operand.hbm [shape: bf16[16,128], index: 0, kind: input, shape index: {}]
  %s1 = inlined_call_operand.hbm [shape: bf16[16,128], index: 1, kind: input, shape index: {}]
  %s2 = inlined_call_operand.hbm [shape: bf16[128,512], index: 2, kind: input, shape index: {}]
  %s3 = inlined_call_operand.hbm [shape: f32[1,512], index: 3, kind: input, shape index: {}]
  %s4 = inlined_call_operand.hbm [shape: bf16[128,512], index: 4, kind: input, shape index: {}]
  %s5 = inlined_call_operand.vmem [shape: f32[1,512], index: 5, kind: input, shape index: {}]
  %s6 = inlined_call_operand.hbm [shape: bf16[256,128], index: 6, kind: input, shape index: {}]
  %s7 = inlined_call_operand.vmem [shape: f32[1,128], index: 7, kind: input, shape index: {}]
  %s8 = inlined_call_operand.hbm [shape: f32[16,128], index: 8, kind: output, shape index: {}]
  %s9 = sld [smem:[#allocation0]]
  $region66: #{tpu_custom_call.1} parent=0
    _
  %s11 = ssub.s32 1, %s9
  %s12 = scalar_select 0, %s11, %s9
  $region1: #{tpu_custom_call.1} parent=0
    #allocation2 [shape = 'u8[4096]{0}', space=vmem, size = 0x1000, scoped, tag = 'input window, operand 0, single buffered']
    #allocation3 [shape = 's32[1]{0}', space=sflag, size = 0x4, scoped, tag = 'scoped memory for tpu_custom_call.1']
    #allocation4 [shape = 's32[1]{0}', space=sflag, size = 0x4, scoped, tag = 'scoped memory for tpu_custom_call.1']
    #allocation5 [shape = 'u8[4096]{0}', space=vmem, size = 0x1000, scoped, tag = 'input window, operand 1, single buffered']
    #allocation6 [shape = 's32[1]{0}', space=sflag, size = 0x4, scoped, tag = 'scoped memory for tpu_custom_call.1']
    #allocation7 [shape = 'u8[131072]{0}', space=vmem, size = 0x20000, scoped, tag = 'input window, operand 2, single buffered']
    #allocation8 [shape = 'u8[2048]{0}', space=vmem, size = 0x800, scoped, tag = 'input window, operand 3, single buffered']
    #allocation9 [shape = 's32[1]{0}', space=sflag, size = 0x4, scoped, tag = 'scoped memory for tpu_custom_call.1']
    #allocation10 [shape = 'u8[131072]{0}', space=vmem, size = 0x20000, scoped, tag = 'input window, operand 4, single buffered']
    #allocation11 [shape = 'u8[65536]{0}', space=vmem, size = 0x10000, scoped, tag = 'input window, operand 6, single buffered']
    #allocation12 [shape = 's32[1]{0}', space=sflag, size = 0x4, scoped, tag = 'scoped memory for tpu_custom_call.1']
    #allocation13 [shape = 'u8[8192]{0}', space=vmem, size = 0x2000, scoped, tag = 'output window, operand 0, single buffered']
    %13 = vsyncpa [#allocation3], 0
    %14 = vsyncpa [#allocation6], 0
    %15 = vsyncpa [#allocation9], 0
    %16 = vsyncpa [#allocation12], 0
    %17 = vsyncpa [#allocation4], 0
    // Predicated region
    $region2: #{tpu_custom_call.1} parent=1 // pred_check
      _
    $region3: #{tpu_custom_call.1} parent=1 // pred_check_branch
      %19 = sbr.rel (0) target = $region5
    $region4: #{tpu_custom_call.1} parent=1 // pred_region
      %21 = vsyncadd [#allocation3], 0
      %s22 = sshll.u32 %s0, 4
      %s23 = int_to_ptr.hbm [resolvable:$true] %s22
      %s24 = sshll.u32 [#allocation2], 4
      %s25 = int_to_ptr.vmem [resolvable:$true] %s24
      %30 = dma.hbm_to_vmem [thread:$0]  %s23, 128, %s25, [#allocation3], 64, 64, 4
    $region5: #{tpu_custom_call.1} parent=1 // pred_fallthru
      _
    // Predicated region
    $region6: #{tpu_custom_call.1} parent=1 // pred_check
      _
    $region7: #{tpu_custom_call.1} parent=1 // pred_check_branch
      %32 = sbr.rel (0) target = $region9
    $region8: #{tpu_custom_call.1} parent=1 // pred_region
      %34 = vsyncadd [#allocation6], 0
      %s35 = sshll.u32 %s1, 4
      %s36 = int_to_ptr.hbm [resolvable:$true] %s35
      %s37 = sshll.u32 [#allocation5], 4
      %s38 = int_to_ptr.vmem [resolvable:$true] %s37
      %43 = dma.hbm_to_vmem [thread:$0]  %s36, 128, %s38, [#allocation6], 64, 64, 4
    $region9: #{tpu_custom_call.1} parent=1 // pred_fallthru
      _
    // Predicated region
    $region10: #{tpu_custom_call.1} parent=1 // pred_check
      _
    $region11: #{tpu_custom_call.1} parent=1 // pred_check_branch
      %45 = sbr.rel (0) target = $region13
    $region12: #{tpu_custom_call.1} parent=1 // pred_region
      %47 = vsyncadd [#allocation6], 0
      %s48 = sshll.u32 %s2, 4
      %s49 = int_to_ptr.hbm [resolvable:$true] %s48
      %s50 = sshll.u32 [#allocation7], 4
      %s51 = int_to_ptr.vmem [resolvable:$true] %s50
      %56 = dma.hbm_to_vmem [thread:$0]  %s49, 4096, %s51, [#allocation6], 256, 256, 16
    $region13: #{tpu_custom_call.1} parent=1 // pred_fallthru
      _
    // Predicated region
    $region14: #{tpu_custom_call.1} parent=1 // pred_check
      _
    $region15: #{tpu_custom_call.1} parent=1 // pred_check_branch
      %58 = sbr.rel (0) target = $region17
    $region16: #{tpu_custom_call.1} parent=1 // pred_region
      %60 = vsyncadd [#allocation9], 0
      %s62 = sshll.u32 %s3, 4
      %s63 = int_to_ptr.hbm [resolvable:$true] %s62
      %s64 = sshll.u32 [#allocation8], 4
      %s65 = int_to_ptr.vmem [resolvable:$true] %s64
      %67 = dma.hbm_to_vmem [thread:$0]  %s63, 64, %s65, [#allocation9]
    $region17: #{tpu_custom_call.1} parent=1 // pred_fallthru
      _
    // Predicated region
    $region18: #{tpu_custom_call.1} parent=1 // pred_check
      _
    $region19: #{tpu_custom_call.1} parent=1 // pred_check_branch
      %69 = sbr.rel (0) target = $region21
    $region20: #{tpu_custom_call.1} parent=1 // pred_region
      %71 = vsyncadd [#allocation9], 0
      %s72 = sshll.u32 %s4, 4
      %s73 = int_to_ptr.hbm [resolvable:$true] %s72
      %s74 = sshll.u32 [#allocation10], 4
      %s75 = int_to_ptr.vmem [resolvable:$true] %s74
      %80 = dma.hbm_to_vmem [thread:$0]  %s73, 4096, %s75, [#allocation9], 256, 256, 16
    $region21: #{tpu_custom_call.1} parent=1 // pred_fallthru
      _
    // Predicated region
    $region22: #{tpu_custom_call.1} parent=1 // pred_check
      _
    $region23: #{tpu_custom_call.1} parent=1 // pred_check_branch
      %82 = sbr.rel (0) target = $region25
    $region24: #{tpu_custom_call.1} parent=1 // pred_region
      _
    $region25: #{tpu_custom_call.1} parent=1 // pred_fallthru
      _
    // Predicated region
    $region26: #{tpu_custom_call.1} parent=1 // pred_check
      _
    $region27: #{tpu_custom_call.1} parent=1 // pred_check_branch
      %84 = sbr.rel (0) target = $region29
    $region28: #{tpu_custom_call.1} parent=1 // pred_region
      %86 = vsyncadd [#allocation12], 0
      %s87 = sshll.u32 %s6, 4
      %s88 = int_to_ptr.hbm [resolvable:$true] %s87
      %s89 = sshll.u32 [#allocation11], 4
      %s90 = int_to_ptr.vmem [resolvable:$true] %s89
      %95 = dma.hbm_to_vmem [thread:$0]  %s88, 2048, %s90, [#allocation12], 64, 64, 4
    $region29: #{tpu_custom_call.1} parent=1 // pred_fallthru
      _
    // Predicated region
    $region30: #{tpu_custom_call.1} parent=1 // pred_check
      _
    $region31: #{tpu_custom_call.1} parent=1 // pred_check_branch
      %97 = sbr.rel (0) target = $region33
    $region32: #{tpu_custom_call.1} parent=1 // pred_region
      _
    $region33: #{tpu_custom_call.1} parent=1 // pred_fallthru
      _
    // Predicated region
    $region34: #{tpu_custom_call.1} parent=1 // pred_check
      _
    $region35: #{tpu_custom_call.1} parent=1 // pred_check_branch
      %99 = sbr.rel (0) target = $region37
    $region36: #{tpu_custom_call.1} parent=1 // pred_region
      %101 = dma.done [#allocation3], 128
    $region37: #{tpu_custom_call.1} parent=1 // pred_fallthru
      _
    // Predicated region
    $region38: #{tpu_custom_call.1} parent=1 // pred_check
      _
    $region39: #{tpu_custom_call.1} parent=1 // pred_check_branch
      %103 = sbr.rel (0) target = $region41
    $region40: #{tpu_custom_call.1} parent=1 // pred_region
      %105 = dma.done [#allocation6], 128
    $region41: #{tpu_custom_call.1} parent=1 // pred_fallthru
      _
    // Predicated region
    $region42: #{tpu_custom_call.1} parent=1 // pred_check
      _
    $region43: #{tpu_custom_call.1} parent=1 // pred_check_branch
      %107 = sbr.rel (0) target = $region45
    $region44: #{tpu_custom_call.1} parent=1 // pred_region
      %109 = dma.done [#allocation6], 4096
    $region45: #{tpu_custom_call.1} parent=1 // pred_fallthru
      _
    // Predicated region
    $region46: #{tpu_custom_call.1} parent=1 // pred_check
      _
    $region47: #{tpu_custom_call.1} parent=1 // pred_check_branch
      %111 = sbr.rel (0) target = $region49
    $region48: #{tpu_custom_call.1} parent=1 // pred_region
      %113 = dma.done [#allocation9], 64
    $region49: #{tpu_custom_call.1} parent=1 // pred_fallthru
      _
    // Predicated region
    $region50: #{tpu_custom_call.1} parent=1 // pred_check
      _
    $region51: #{tpu_custom_call.1} parent=1 // pred_check_branch
      %115 = sbr.rel (0) target = $region53
    $region52: #{tpu_custom_call.1} parent=1 // pred_region
      %117 = dma.done [#allocation9], 4096
    $region53: #{tpu_custom_call.1} parent=1 // pred_fallthru
      _
    // Predicated region
    $region54: #{tpu_custom_call.1} parent=1 // pred_check
      _
    $region55: #{tpu_custom_call.1} parent=1 // pred_check_branch
      %119 = sbr.rel (0) target = $region57
    $region56: #{tpu_custom_call.1} parent=1 // pred_region
      %121 = dma.done [#allocation12], 2048
    $region57: #{tpu_custom_call.1} parent=1 // pred_fallthru
      _
    %v122 = vld [vmem:[#allocation2] sm:$0xf]
    %v123 = vld [vmem:[#allocation2 + $0x4] sm:$0xf]
    %v124 = vld [vmem:[#allocation5] sm:$0xf]
    %v125 = vld [vmem:[#allocation5 + $0x4] sm:$0xf]
    %v126 = vld [vmem:[#allocation7] sm:$0xff]
    %v127 = vld [vmem:[#allocation7 + $0x8] sm:$0xff]
    %v128 = vld [vmem:[#allocation7 + $0x10] sm:$0xff]
    %v129 = vld [vmem:[#allocation7 + $0x18] sm:$0xff]
    %v130 = vld [vmem:[#allocation7 + $0x20] sm:$0xff]
    %v131 = vld [vmem:[#allocation7 + $0x28] sm:$0xff]
    %v132 = vld [vmem:[#allocation7 + $0x30] sm:$0xff]
    %v133 = vld [vmem:[#allocation7 + $0x38] sm:$0xff]
    %v134 = vld [vmem:[#allocation7 + $0x40] sm:$0xff]
    %v135 = vld [vmem:[#allocation7 + $0x48] sm:$0xff]
    %v136 = vld [vmem:[#allocation7 + $0x50] sm:$0xff]
    %v137 = vld [vmem:[#allocation7 + $0x58] sm:$0xff]
    %v138 = vld [vmem:[#allocation7 + $0x60] sm:$0xff]
    %v139 = vld [vmem:[#allocation7 + $0x68] sm:$0xff]
    %v140 = vld [vmem:[#allocation7 + $0x70] sm:$0xff]
    %v141 = vld [vmem:[#allocation7 + $0x78] sm:$0xff]
    %v142 = vld [vmem:[#allocation7 + $0x80] sm:$0xff]
    %v143 = vld [vmem:[#allocation7 + $0x88] sm:$0xff]
    %v144 = vld [vmem:[#allocation7 + $0x90] sm:$0xff]
    %v145 = vld [vmem:[#allocation7 + $0x98] sm:$0xff]
    %v146 = vld [vmem:[#allocation7 + $0xa0] sm:$0xff]
    %v147 = vld [vmem:[#allocation7 + $0xa8] sm:$0xff]
    %v148 = vld [vmem:[#allocation7 + $0xb0] sm:$0xff]
    %v149 = vld [vmem:[#allocation7 + $0xb8] sm:$0xff]
    %v150 = vld [vmem:[#allocation7 + $0xc0] sm:$0xff]
    %v151 = vld [vmem:[#allocation7 + $0xc8] sm:$0xff]
    %v152 = vld [vmem:[#allocation7 + $0xd0] sm:$0xff]
    %v153 = vld [vmem:[#allocation7 + $0xd8] sm:$0xff]
    %v154 = vld [vmem:[#allocation7 + $0xe0] sm:$0xff]
    %v155 = vld [vmem:[#allocation7 + $0xe8] sm:$0xff]
    %v156 = vld [vmem:[#allocation7 + $0xf0] sm:$0xff]
    %v157 = vld [vmem:[#allocation7 + $0xf8] sm:$0xff]
    %v158 = vld [vmem:[#allocation8] sm:$0xf]
    %v160 = vperm.slane %v158, 0
    %v161 = vperm.slane %v158, 1
    %v162 = vperm.slane %v158, 2
    %v163 = vperm.slane %v158, 3
    %v170 = vunpack.c.l.b16 %v122
    %v171 = vunpack.c.l.b16 %v123
    %v172 = vpack.c.b16 %v171, %v170
    %v206 = vunpack.c.l.b16 %v126
    %v207 = vunpack.c.h.b16 %v126
    %v208 = vunpack.c.l.b16 %v127
    %v209 = vunpack.c.h.b16 %v127
    %v210 = vunpack.c.l.b16 %v128
    %v211 = vunpack.c.h.b16 %v128
    %v212 = vunpack.c.l.b16 %v129
    %v213 = vunpack.c.h.b16 %v129
    %v214 = vunpack.c.l.b16 %v130
    %v215 = vunpack.c.h.b16 %v130
    %v216 = vunpack.c.l.b16 %v131
    %v217 = vunpack.c.h.b16 %v131
    %v218 = vunpack.c.l.b16 %v132
    %v219 = vunpack.c.h.b16 %v132
    %v220 = vunpack.c.l.b16 %v133
    %v221 = vunpack.c.h.b16 %v133
    %v222 = vunpack.c.l.b16 %v134
    %v223 = vunpack.c.h.b16 %v134
    %v224 = vunpack.c.l.b16 %v135
    %v225 = vunpack.c.h.b16 %v135
    %v226 = vunpack.c.l.b16 %v136
    %v227 = vunpack.c.h.b16 %v136
    %v228 = vunpack.c.l.b16 %v137
    %v229 = vunpack.c.h.b16 %v137
    %v230 = vunpack.c.l.b16 %v138
    %v231 = vunpack.c.h.b16 %v138
    %v232 = vunpack.c.l.b16 %v139
    %v233 = vunpack.c.h.b16 %v139
    %v234 = vunpack.c.l.b16 %v140
    %v235 = vunpack.c.h.b16 %v140
    %v236 = vunpack.c.l.b16 %v141
    %v237 = vunpack.c.h.b16 %v141
    %v238 = vunpack.c.l.b16 %v142
    %v239 = vunpack.c.h.b16 %v142
    %v240 = vunpack.c.l.b16 %v143
    %v241 = vunpack.c.h.b16 %v143
    %v242 = vunpack.c.l.b16 %v144
    %v243 = vunpack.c.h.b16 %v144
    %v244 = vunpack.c.l.b16 %v145
    %v245 = vunpack.c.h.b16 %v145
    %v246 = vunpack.c.l.b16 %v146
    %v247 = vunpack.c.h.b16 %v146
    %v248 = vunpack.c.l.b16 %v147
    %v249 = vunpack.c.h.b16 %v147
    %v250 = vunpack.c.l.b16 %v148
    %v251 = vunpack.c.h.b16 %v148
    %v252 = vunpack.c.l.b16 %v149
    %v253 = vunpack.c.h.b16 %v149
    %v254 = vunpack.c.l.b16 %v150
    %v255 = vunpack.c.h.b16 %v150
    %v256 = vunpack.c.l.b16 %v151
    %v257 = vunpack.c.h.b16 %v151
    %v258 = vunpack.c.l.b16 %v152
    %v259 = vunpack.c.h.b16 %v152
    %v260 = vunpack.c.l.b16 %v153
    %v261 = vunpack.c.h.b16 %v153
    %v262 = vunpack.c.l.b16 %v154
    %v263 = vunpack.c.h.b16 %v154
    %v264 = vunpack.c.l.b16 %v155
    %v265 = vunpack.c.h.b16 %v155
    %v266 = vunpack.c.l.b16 %v156
    %v267 = vunpack.c.h.b16 %v156
    %v268 = vunpack.c.l.b16 %v157
    %v269 = vunpack.c.h.b16 %v157
    %v270 = vpack.c.b16 %v210, %v206
    %v271 = vpack.c.b16 %v211, %v207
    %v272 = vpack.c.b16 %v212, %v208
    %v273 = vpack.c.b16 %v213, %v209
    %v274 = vpack.c.b16 %v218, %v214
    %v275 = vpack.c.b16 %v219, %v215
    %v276 = vpack.c.b16 %v220, %v216
    %v277 = vpack.c.b16 %v221, %v217
    %v278 = vpack.c.b16 %v226, %v222
    %v279 = vpack.c.b16 %v227, %v223
    %v280 = vpack.c.b16 %v228, %v224
    %v281 = vpack.c.b16 %v229, %v225
    %v282 = vpack.c.b16 %v234, %v230
    %v283 = vpack.c.b16 %v235, %v231
    %v284 = vpack.c.b16 %v236, %v232
    %v285 = vpack.c.b16 %v237, %v233
    %v286 = vpack.c.b16 %v242, %v238
    %v287 = vpack.c.b16 %v243, %v239
    %v288 = vpack.c.b16 %v244, %v240
    %v289 = vpack.c.b16 %v245, %v241
    %v290 = vpack.c.b16 %v250, %v246
    %v291 = vpack.c.b16 %v251, %v247
    %v292 = vpack.c.b16 %v252, %v248
    %v293 = vpack.c.b16 %v253, %v249
    %v294 = vpack.c.b16 %v258, %v254
    %v295 = vpack.c.b16 %v259, %v255
    %v296 = vpack.c.b16 %v260, %v256
    %v297 = vpack.c.b16 %v261, %v257
    %v298 = vpack.c.b16 %v266, %v262
    %v299 = vpack.c.b16 %v267, %v263
    %v300 = vpack.c.b16 %v268, %v264
    %v301 = vpack.c.b16 %v269, %v265
    %334 = vmatpush.bf16.msra.mxu0 %v298
    %335 = vmatpush.bf16.msra.mxu0 %v294
    %336 = vmatpush.bf16.msra.mxu0 %v290
    %337 = vmatpush.bf16.msra.mxu0 %v286
    %338 = vmatpush.bf16.msra.mxu0 %v282
    %339 = vmatpush.bf16.msra.mxu0 %v278
    %340 = vmatpush.bf16.msra.mxu0 %v274
    %341 = vmatpush.bf16.msra.mxu0 %v270
    %342 = vmatmul.bf16.gmra.mxu0 %v172
    %v343 = vpop.f32.mrf.mxu0
    %v344 = vadd.f32 %v160, %v343
    %v345 = vpop.f32.mrf.mxu0
    %v346 = vadd.f32 %v160, %v345
    %347 = vdwg.mxu0
    %348 = vmatpush.bf16.msra.mxu0 %v299
    %349 = vmatpush.bf16.msra.mxu0 %v295
    %350 = vmatpush.bf16.msra.mxu0 %v291
    %351 = vmatpush.bf16.msra.mxu0 %v287
    %352 = vmatpush.bf16.msra.mxu0 %v283
    %353 = vmatpush.bf16.msra.mxu0 %v279
    %354 = vmatpush.bf16.msra.mxu0 %v275
    %355 = vmatpush.bf16.msra.mxu0 %v271
    %356 = vmatmul.bf16.gmra.mxu0 %v172
    %v357 = vpop.f32.mrf.mxu0
    %v358 = vadd.f32 %v161, %v357
    %v359 = vpop.f32.mrf.mxu0
    %v360 = vadd.f32 %v161, %v359
    %361 = vdwg.mxu0
    %362 = vmatpush.bf16.msra.mxu0 %v300
    %363 = vmatpush.bf16.msra.mxu0 %v296
    %364 = vmatpush.bf16.msra.mxu0 %v292
    %365 = vmatpush.bf16.msra.mxu0 %v288
    %366 = vmatpush.bf16.msra.mxu0 %v284
    %367 = vmatpush.bf16.msra.mxu0 %v280
    %368 = vmatpush.bf16.msra.mxu0 %v276
    %369 = vmatpush.bf16.msra.mxu0 %v272
    %370 = vmatmul.bf16.gmra.mxu0 %v172
    %v371 = vpop.f32.mrf.mxu0
    %v372 = vadd.f32 %v162, %v371
    %v373 = vpop.f32.mrf.mxu0
    %v374 = vadd.f32 %v162, %v373
    %375 = vdwg.mxu0
    %376 = vmatpush.bf16.msra.mxu0 %v301
    %377 = vmatpush.bf16.msra.mxu0 %v297
    %378 = vmatpush.bf16.msra.mxu0 %v293
    %379 = vmatpush.bf16.msra.mxu0 %v289
    %380 = vmatpush.bf16.msra.mxu0 %v285
    %381 = vmatpush.bf16.msra.mxu0 %v281
    %382 = vmatpush.bf16.msra.mxu0 %v277
    %383 = vmatpush.bf16.msra.mxu0 %v273
    %384 = vmatmul.bf16.gmra.mxu0 %v172
    %v385 = vpop.f32.mrf.mxu0
    %v386 = vadd.f32 %v163, %v385
    %v387 = vpop.f32.mrf.mxu0
    %v388 = vadd.f32 %v163, %v387
    %389 = vdwg.mxu0
    %v390 = vmax.f32 %v344, 0.0
    %v391 = vmax.f32 %v358, 0.0
    %v392 = vmax.f32 %v372, 0.0
    %v393 = vmax.f32 %v386, 0.0
    %v394 = vmax.f32 %v346, 0.0
    %v395 = vmax.f32 %v360, 0.0
    %v396 = vmax.f32 %v374, 0.0
    %v397 = vmax.f32 %v388, 0.0
    %v398 = vld [vmem:[#allocation10] sm:$0xff]
    %v399 = vld [vmem:[#allocation10 + $0x8] sm:$0xff]
    %v400 = vld [vmem:[#allocation10 + $0x10] sm:$0xff]
    %v401 = vld [vmem:[#allocation10 + $0x18] sm:$0xff]
    %v402 = vld [vmem:[#allocation10 + $0x20] sm:$0xff]
    %v403 = vld [vmem:[#allocation10 + $0x28] sm:$0xff]
    %v404 = vld [vmem:[#allocation10 + $0x30] sm:$0xff]
    %v405 = vld [vmem:[#allocation10 + $0x38] sm:$0xff]
    %v406 = vld [vmem:[#allocation10 + $0x40] sm:$0xff]
    %v407 = vld [vmem:[#allocation10 + $0x48] sm:$0xff]
    %v408 = vld [vmem:[#allocation10 + $0x50] sm:$0xff]
    %v409 = vld [vmem:[#allocation10 + $0x58] sm:$0xff]
    %v410 = vld [vmem:[#allocation10 + $0x60] sm:$0xff]
    %v411 = vld [vmem:[#allocation10 + $0x68] sm:$0xff]
    %v412 = vld [vmem:[#allocation10 + $0x70] sm:$0xff]
    %v413 = vld [vmem:[#allocation10 + $0x78] sm:$0xff]
    %v414 = vld [vmem:[#allocation10 + $0x80] sm:$0xff]
    %v415 = vld [vmem:[#allocation10 + $0x88] sm:$0xff]
    %v416 = vld [vmem:[#allocation10 + $0x90] sm:$0xff]
    %v417 = vld [vmem:[#allocation10 + $0x98] sm:$0xff]
    %v418 = vld [vmem:[#allocation10 + $0xa0] sm:$0xff]
    %v419 = vld [vmem:[#allocation10 + $0xa8] sm:$0xff]
    %v420 = vld [vmem:[#allocation10 + $0xb0] sm:$0xff]
    %v421 = vld [vmem:[#allocation10 + $0xb8] sm:$0xff]
    %v422 = vld [vmem:[#allocation10 + $0xc0] sm:$0xff]
    %v423 = vld [vmem:[#allocation10 + $0xc8] sm:$0xff]
    %v424 = vld [vmem:[#allocation10 + $0xd0] sm:$0xff]
    %v425 = vld [vmem:[#allocation10 + $0xd8] sm:$0xff]
    %v426 = vld [vmem:[#allocation10 + $0xe0] sm:$0xff]
    %v427 = vld [vmem:[#allocation10 + $0xe8] sm:$0xff]
    %v428 = vld [vmem:[#allocation10 + $0xf0] sm:$0xff]
    %v429 = vld [vmem:[#allocation10 + $0xf8] sm:$0xff]
    %v430 = vld [vmem:[%s5] sm:$0xf]
    %v432 = vperm.slane %v430, 0
    %v433 = vperm.slane %v430, 1
    %v434 = vperm.slane %v430, 2
    %v435 = vperm.slane %v430, 3
    %v442 = vunpack.c.l.b16 %v124
    %v443 = vunpack.c.l.b16 %v125
    %v444 = vpack.c.b16 %v443, %v442
    %v478 = vunpack.c.l.b16 %v398
    %v479 = vunpack.c.h.b16 %v398
    %v480 = vunpack.c.l.b16 %v399
    %v481 = vunpack.c.h.b16 %v399
    %v482 = vunpack.c.l.b16 %v400
    %v483 = vunpack.c.h.b16 %v400
    %v484 = vunpack.c.l.b16 %v401
    %v485 = vunpack.c.h.b16 %v401
    %v486 = vunpack.c.l.b16 %v402
    %v487 = vunpack.c.h.b16 %v402
    %v488 = vunpack.c.l.b16 %v403
    %v489 = vunpack.c.h.b16 %v403
    %v490 = vunpack.c.l.b16 %v404
    %v491 = vunpack.c.h.b16 %v404
    %v492 = vunpack.c.l.b16 %v405
    %v493 = vunpack.c.h.b16 %v405
    %v494 = vunpack.c.l.b16 %v406
    %v495 = vunpack.c.h.b16 %v406
    %v496 = vunpack.c.l.b16 %v407
    %v497 = vunpack.c.h.b16 %v407
    %v498 = vunpack.c.l.b16 %v408
    %v499 = vunpack.c.h.b16 %v408
    %v500 = vunpack.c.l.b16 %v409
    %v501 = vunpack.c.h.b16 %v409
    %v502 = vunpack.c.l.b16 %v410
    %v503 = vunpack.c.h.b16 %v410
    %v504 = vunpack.c.l.b16 %v411
    %v505 = vunpack.c.h.b16 %v411
    %v506 = vunpack.c.l.b16 %v412
    %v507 = vunpack.c.h.b16 %v412
    %v508 = vunpack.c.l.b16 %v413
    %v509 = vunpack.c.h.b16 %v413
    %v510 = vunpack.c.l.b16 %v414
    %v511 = vunpack.c.h.b16 %v414
    %v512 = vunpack.c.l.b16 %v415
    %v513 = vunpack.c.h.b16 %v415
    %v514 = vunpack.c.l.b16 %v416
    %v515 = vunpack.c.h.b16 %v416
    %v516 = vunpack.c.l.b16 %v417
    %v517 = vunpack.c.h.b16 %v417
    %v518 = vunpack.c.l.b16 %v418
    %v519 = vunpack.c.h.b16 %v418
    %v520 = vunpack.c.l.b16 %v419
    %v521 = vunpack.c.h.b16 %v419
    %v522 = vunpack.c.l.b16 %v420
    %v523 = vunpack.c.h.b16 %v420
    %v524 = vunpack.c.l.b16 %v421
    %v525 = vunpack.c.h.b16 %v421
    %v526 = vunpack.c.l.b16 %v422
    %v527 = vunpack.c.h.b16 %v422
    %v528 = vunpack.c.l.b16 %v423
    %v529 = vunpack.c.h.b16 %v423
    %v530 = vunpack.c.l.b16 %v424
    %v531 = vunpack.c.h.b16 %v424
    %v532 = vunpack.c.l.b16 %v425
    %v533 = vunpack.c.h.b16 %v425
    %v534 = vunpack.c.l.b16 %v426
    %v535 = vunpack.c.h.b16 %v426
    %v536 = vunpack.c.l.b16 %v427
    %v537 = vunpack.c.h.b16 %v427
    %v538 = vunpack.c.l.b16 %v428
    %v539 = vunpack.c.h.b16 %v428
    %v540 = vunpack.c.l.b16 %v429
    %v541 = vunpack.c.h.b16 %v429
    %v542 = vpack.c.b16 %v482, %v478
    %v543 = vpack.c.b16 %v483, %v479
    %v544 = vpack.c.b16 %v484, %v480
    %v545 = vpack.c.b16 %v485, %v481
    %v546 = vpack.c.b16 %v490, %v486
    %v547 = vpack.c.b16 %v491, %v487
    %v548 = vpack.c.b16 %v492, %v488
    %v549 = vpack.c.b16 %v493, %v489
    %v550 = vpack.c.b16 %v498, %v494
    %v551 = vpack.c.b16 %v499, %v495
    %v552 = vpack.c.b16 %v500, %v496
    %v553 = vpack.c.b16 %v501, %v497
    %v554 = vpack.c.b16 %v506, %v502
    %v555 = vpack.c.b16 %v507, %v503
    %v556 = vpack.c.b16 %v508, %v504
    %v557 = vpack.c.b16 %v509, %v505
    %v558 = vpack.c.b16 %v514, %v510
    %v559 = vpack.c.b16 %v515, %v511
    %v560 = vpack.c.b16 %v516, %v512
    %v561 = vpack.c.b16 %v517, %v513
    %v562 = vpack.c.b16 %v522, %v518
    %v563 = vpack.c.b16 %v523, %v519
    %v564 = vpack.c.b16 %v524, %v520
    %v565 = vpack.c.b16 %v525, %v521
    %v566 = vpack.c.b16 %v530, %v526
    %v567 = vpack.c.b16 %v531, %v527
    %v568 = vpack.c.b16 %v532, %v528
    %v569 = vpack.c.b16 %v533, %v529
    %v570 = vpack.c.b16 %v538, %v534
    %v571 = vpack.c.b16 %v539, %v535
    %v572 = vpack.c.b16 %v540, %v536
    %v573 = vpack.c.b16 %v541, %v537
    %606 = vmatpush.bf16.msra.mxu0 %v570
    %607 = vmatpush.bf16.msra.mxu0 %v566
    %608 = vmatpush.bf16.msra.mxu0 %v562
    %609 = vmatpush.bf16.msra.mxu0 %v558
    %610 = vmatpush.bf16.msra.mxu0 %v554
    %611 = vmatpush.bf16.msra.mxu0 %v550
    %612 = vmatpush.bf16.msra.mxu0 %v546
    %613 = vmatpush.bf16.msra.mxu0 %v542
    %614 = vmatmul.bf16.gmra.mxu0 %v444
    %v615 = vpop.f32.mrf.mxu0
    %v616 = vadd.f32 %v432, %v615
    %v617 = vpop.f32.mrf.mxu0
    %v618 = vadd.f32 %v432, %v617
    %619 = vdwg.mxu0
    %620 = vmatpush.bf16.msra.mxu0 %v571
    %621 = vmatpush.bf16.msra.mxu0 %v567
    %622 = vmatpush.bf16.msra.mxu0 %v563
    %623 = vmatpush.bf16.msra.mxu0 %v559
    %624 = vmatpush.bf16.msra.mxu0 %v555
    %625 = vmatpush.bf16.msra.mxu0 %v551
    %626 = vmatpush.bf16.msra.mxu0 %v547
    %627 = vmatpush.bf16.msra.mxu0 %v543
    %628 = vmatmul.bf16.gmra.mxu0 %v444
    %v629 = vpop.f32.mrf.mxu0
    %v630 = vadd.f32 %v433, %v629
    %v631 = vpop.f32.mrf.mxu0
    %v632 = vadd.f32 %v433, %v631
    %633 = vdwg.mxu0
    %634 = vmatpush.bf16.msra.mxu0 %v572
    %635 = vmatpush.bf16.msra.mxu0 %v568
    %636 = vmatpush.bf16.msra.mxu0 %v564
    %637 = vmatpush.bf16.msra.mxu0 %v560
    %638 = vmatpush.bf16.msra.mxu0 %v556
    %639 = vmatpush.bf16.msra.mxu0 %v552
    %640 = vmatpush.bf16.msra.mxu0 %v548
    %641 = vmatpush.bf16.msra.mxu0 %v544
    %642 = vmatmul.bf16.gmra.mxu0 %v444
    %v643 = vpop.f32.mrf.mxu0
    %v644 = vadd.f32 %v434, %v643
    %v645 = vpop.f32.mrf.mxu0
    %v646 = vadd.f32 %v434, %v645
    %647 = vdwg.mxu0
    %648 = vmatpush.bf16.msra.mxu0 %v573
    %649 = vmatpush.bf16.msra.mxu0 %v569
    %650 = vmatpush.bf16.msra.mxu0 %v565
    %651 = vmatpush.bf16.msra.mxu0 %v561
    %652 = vmatpush.bf16.msra.mxu0 %v557
    %653 = vmatpush.bf16.msra.mxu0 %v553
    %654 = vmatpush.bf16.msra.mxu0 %v549
    %655 = vmatpush.bf16.msra.mxu0 %v545
    %656 = vmatmul.bf16.gmra.mxu0 %v444
    %v657 = vpop.f32.mrf.mxu0
    %v658 = vadd.f32 %v435, %v657
    %v659 = vpop.f32.mrf.mxu0
    %v660 = vadd.f32 %v435, %v659
    %661 = vdwg.mxu0
    %v662 = vmax.f32 %v616, 0.0
    %v663 = vmax.f32 %v630, 0.0
    %v664 = vmax.f32 %v644, 0.0
    %v665 = vmax.f32 %v658, 0.0
    %v666 = vmax.f32 %v618, 0.0
    %v667 = vmax.f32 %v632, 0.0
    %v668 = vmax.f32 %v646, 0.0
    %v669 = vmax.f32 %v660, 0.0
    %v670 = vmul.f32 %v390, %v662
    %v671 = vmul.f32 %v391, %v663
    %v672 = vmul.f32 %v394, %v666
    %v673 = vmul.f32 %v395, %v667
    %v674 = vmul.f32 %v392, %v664
    %v675 = vmul.f32 %v393, %v665
    %v676 = vmul.f32 %v396, %v668
    %v677 = vmul.f32 %v397, %v669
    %v678 = vmul.f32 %v674, %v670
    %v679 = vmul.f32 %v675, %v671
    %v680 = vmul.f32 %v676, %v672
    %v681 = vmul.f32 %v677, %v673
    %v682 = vadd.f32 %v670, %v671
    %v683 = vadd.f32 %v672, %v673
    %v684 = vadd.f32 %v678, %v679
    %v685 = vadd.f32 %v680, %v681
    %v686 = vpack.c.bf16 %v683, %v682
    %v687 = vpack.c.bf16 %v685, %v684
    %v688 = vld [vmem:[#allocation11] sm:$0xf]
    %v689 = vld [vmem:[#allocation11 + $0x4] sm:$0xf]
    %v690 = vld [vmem:[#allocation11 + $0x8] sm:$0xf]
    %v691 = vld [vmem:[#allocation11 + $0xc] sm:$0xf]
    %v692 = vld [vmem:[#allocation11 + $0x10] sm:$0xf]
    %v693 = vld [vmem:[#allocation11 + $0x14] sm:$0xf]
    %v694 = vld [vmem:[#allocation11 + $0x18] sm:$0xf]
    %v695 = vld [vmem:[#allocation11 + $0x1c] sm:$0xf]
    %v696 = vld [vmem:[#allocation11 + $0x20] sm:$0xf]
    %v697 = vld [vmem:[#allocation11 + $0x24] sm:$0xf]
    %v698 = vld [vmem:[#allocation11 + $0x28] sm:$0xf]
    %v699 = vld [vmem:[#allocation11 + $0x2c] sm:$0xf]
    %v700 = vld [vmem:[#allocation11 + $0x30] sm:$0xf]
    %v701 = vld [vmem:[#allocation11 + $0x34] sm:$0xf]
    %v702 = vld [vmem:[#allocation11 + $0x38] sm:$0xf]
    %v703 = vld [vmem:[#allocation11 + $0x3c] sm:$0xf]
    %v704 = vld [vmem:[#allocation11 + $0x40] sm:$0xf]
    %v705 = vld [vmem:[#allocation11 + $0x44] sm:$0xf]
    %v706 = vld [vmem:[#allocation11 + $0x48] sm:$0xf]
    %v707 = vld [vmem:[#allocation11 + $0x4c] sm:$0xf]
    %v708 = vld [vmem:[#allocation11 + $0x50] sm:$0xf]
    %v709 = vld [vmem:[#allocation11 + $0x54] sm:$0xf]
    %v710 = vld [vmem:[#allocation11 + $0x58] sm:$0xf]
    %v711 = vld [vmem:[#allocation11 + $0x5c] sm:$0xf]
    %v712 = vld [vmem:[#allocation11 + $0x60] sm:$0xf]
    %v713 = vld [vmem:[#allocation11 + $0x64] sm:$0xf]
    %v714 = vld [vmem:[#allocation11 + $0x68] sm:$0xf]
    %v715 = vld [vmem:[#allocation11 + $0x6c] sm:$0xf]
    %v716 = vld [vmem:[#allocation11 + $0x70] sm:$0xf]
    %v717 = vld [vmem:[#allocation11 + $0x74] sm:$0xf]
    %v718 = vld [vmem:[#allocation11 + $0x78] sm:$0xf]
    %v719 = vld [vmem:[#allocation11 + $0x7c] sm:$0xf]
    %v720 = vld [vmem:[%s7] sm:$0x1]
    %v722 = vperm.slane %v720, 0
    %v756 = vunpack.c.l.b16 %v688
    %v757 = vunpack.c.l.b16 %v689
    %v758 = vunpack.c.l.b16 %v690
    %v759 = vunpack.c.l.b16 %v691
    %v760 = vunpack.c.l.b16 %v692
    %v761 = vunpack.c.l.b16 %v693
    %v762 = vunpack.c.l.b16 %v694
    %v763 = vunpack.c.l.b16 %v695
    %v764 = vunpack.c.l.b16 %v696
    %v765 = vunpack.c.l.b16 %v697
    %v766 = vunpack.c.l.b16 %v698
    %v767 = vunpack.c.l.b16 %v699
    %v768 = vunpack.c.l.b16 %v700
    %v769 = vunpack.c.l.b16 %v701
    %v770 = vunpack.c.l.b16 %v702
    %v771 = vunpack.c.l.b16 %v703
    %v772 = vunpack.c.l.b16 %v704
    %v773 = vunpack.c.l.b16 %v705
    %v774 = vunpack.c.l.b16 %v706
    %v775 = vunpack.c.l.b16 %v707
    %v776 = vunpack.c.l.b16 %v708
    %v777 = vunpack.c.l.b16 %v709
    %v778 = vunpack.c.l.b16 %v710
    %v779 = vunpack.c.l.b16 %v711
    %v780 = vunpack.c.l.b16 %v712
    %v781 = vunpack.c.l.b16 %v713
    %v782 = vunpack.c.l.b16 %v714
    %v783 = vunpack.c.l.b16 %v715
    %v784 = vunpack.c.l.b16 %v716
    %v785 = vunpack.c.l.b16 %v717
    %v786 = vunpack.c.l.b16 %v718
    %v787 = vunpack.c.l.b16 %v719
    %v788 = vpack.c.b16 %v757, %v756
    %v789 = vpack.c.b16 %v759, %v758
    %v790 = vpack.c.b16 %v761, %v760
    %v791 = vpack.c.b16 %v763, %v762
    %v792 = vpack.c.b16 %v765, %v764
    %v793 = vpack.c.b16 %v767, %v766
    %v794 = vpack.c.b16 %v769, %v768
    %v795 = vpack.c.b16 %v771, %v770
    %v796 = vpack.c.b16 %v773, %v772
    %v797 = vpack.c.b16 %v775, %v774
    %v798 = vpack.c.b16 %v777, %v776
    %v799 = vpack.c.b16 %v779, %v778
    %v800 = vpack.c.b16 %v781, %v780
    %v801 = vpack.c.b16 %v783, %v782
    %v802 = vpack.c.b16 %v785, %v784
    %v803 = vpack.c.b16 %v787, %v786
    %820 = vmatpush.bf16.msra.mxu0 %v795
    %821 = vmatpush.bf16.msra.mxu0 %v794
    %822 = vmatpush.bf16.msra.mxu0 %v793
    %823 = vmatpush.bf16.msra.mxu0 %v792
    %824 = vmatpush.bf16.msra.mxu0 %v791
    %825 = vmatpush.bf16.msra.mxu0 %v790
    %826 = vmatpush.bf16.msra.mxu0 %v789
    %827 = vmatpush.bf16.msra.mxu0 %v788
    %828 = vmatmul.bf16.gmra.mxu0 %v686
    %v829 = vpop.f32.mrf.mxu0
    %v830 = vadd.f32 %v722, %v829
    %v831 = vpop.f32.mrf.mxu0
    %v832 = vadd.f32 %v722, %v831
    %833 = vdwg.mxu0
    %834 = vmatpush.bf16.msra.mxu0 %v803
    %835 = vmatpush.bf16.msra.mxu0 %v802
    %836 = vmatpush.bf16.msra.mxu0 %v801
    %837 = vmatpush.bf16.msra.mxu0 %v800
    %838 = vmatpush.bf16.msra.mxu0 %v799
    %839 = vmatpush.bf16.msra.mxu0 %v798
    %840 = vmatpush.bf16.msra.mxu0 %v797
    %841 = vmatpush.bf16.msra.mxu0 %v796
    %842 = vmatmul.bf16.gmra.mxu0 %v687
    %v843 = vpop.f32.mrf.mxu0
    %v844 = vadd.f32 %v830, %v843
    %v845 = vpop.f32.mrf.mxu0
    %v846 = vadd.f32 %v832, %v845
    %847 = vdwg.mxu0
    %v848 = vmax.f32 %v844, 0.0
    %v849 = vmax.f32 %v846, 0.0
    %850 = vst [vmem:[#allocation13] sm:$0xff] %v848
    %851 = vst [vmem:[#allocation13 + $0x8] sm:$0xff] %v849
    // Predicated region
    $region58: #{tpu_custom_call.1} parent=1 // pred_check
      _
    $region59: #{tpu_custom_call.1} parent=1 // pred_check_branch
      %853 = sbr.rel (0) target = $region61
    $region60: #{tpu_custom_call.1} parent=1 // pred_region
      %855 = vsyncadd [#allocation4], 0
      %s856 = sshll.u32 [#allocation13], 4
      %s857 = int_to_ptr.vmem [resolvable:$true] %s856
      %s858 = sshll.u32 %s8, 4
      %s859 = int_to_ptr.hbm [resolvable:$true] %s858
      %864 = dma.vmem_to_hbm [thread:$0]  %s857, 256, %s859, [#allocation4], 128, 128, 8
    $region61: #{tpu_custom_call.1} parent=1 // pred_fallthru
      _
    // Predicated region
    $region62: #{tpu_custom_call.1} parent=1 // pred_check
      _
    $region63: #{tpu_custom_call.1} parent=1 // pred_check_branch
      %866 = sbr.rel (0) target = $region65
    $region64: #{tpu_custom_call.1} parent=1 // pred_region
      %868 = dma.done [#allocation4], 256
    $region65: #{tpu_custom_call.1} parent=1 // pred_fallthru
      _
    %869 = vsyncpa [#allocation3], 1
    %870 = vsyncpa [#allocation6], 1
    %871 = vsyncpa [#allocation9], 1
    %872 = vsyncpa [#allocation12], 1
    %873 = vsyncpa [#allocation4], 1

</llo_original>
